<compile_context>
chip_gen: v7x
topology: tpu7x:2x2x1
jax: 0.10.0
libtpu: 0.0.40
codegen_flags: <defaults>
</compile_context>

<pallas_src>
import functools

import jax
import jax.numpy as jnp
from jax.experimental import pallas as pl
from jax.experimental.pallas import tpu as pltpu


_NEG_BIG = -1e30  # finite "-inf": keeps exp/max free of NaN/Inf paths


def _round_up(x, m):
    return ((x + m - 1) // m) * m


def _choose_tile(b):
    """Never below 128 (MXU-sized blocks); 256 when row padding stays small."""
    if _round_up(b, 256) - b <= max(b // 8, 0):
        return 256
    return 128


def _vmem_capacity_bytes():
    try:
        return int(pltpu.get_tpu_info().vmem_capacity_bytes)
    except Exception:
        return 64 * 1024 * 1024  # conservative default (v7x per-core VMEM)


def _simclr_kernel(q_ref, k_ref, o_ref, m_sc, l_sc, pos_sc, *,
                   batch, bp, tile, inv_temp, k_resident, has_pad):
    """One (row_tile, col_tile) step of the tiled NT-Xent loss.

    q_ref: (tile, dp) pre-normalized row embeddings (bf16 or f32).
    k_ref: (tile, dp) streamed column tile, or (n_p, dp) VMEM-resident z.
    o_ref: (tile, 128) per-row loss broadcast across lanes (lane-dense store).
    m_sc, l_sc: (tile, 1) running max / running sum(exp) for online logsumexp.
    pos_sc: (tile, 1) positive logit (cos/temperature) of each row.
    """
    i = pl.program_id(0)
    j = pl.program_id(1)
    n_col = pl.num_programs(1)

    half = bp // tile                 # column tiles per half of z
    first_pad_tile = batch // tile    # first column tile containing padding

    # ---- per-row-tile init of the online-logsumexp state ---------------------
    @pl.when(j == 0)
    def _():
        m_sc[...] = jnp.full(m_sc.shape, _NEG_BIG, jnp.float32)
        l_sc[...] = jnp.zeros(l_sc.shape, jnp.float32)
        pos_sc[...] = jnp.zeros(pos_sc.shape, jnp.float32)

    # ---- MXU: sim block = q_tile @ k_tile^T (operands already normalized) ----
    if k_resident:
        k = k_ref[pl.ds(pl.multiple_of(j * tile, tile), tile), :]
    else:
        k = k_ref[...]
    sim = jax.lax.dot_general(
        q_ref[...], k,
        dimension_numbers=(((1,), (1,)), ((), ())),   # contract last dims: q @ k^T
        preferred_element_type=jnp.float32)
    s = sim * inv_temp                                # cosine / temperature, f32

    # ---- positive logit: diagonal of the partner column tile -----------------
    partner_j = (i + half) % n_col                    # n_col == 2 * half
    @pl.when(j == partner_j)
    def _():
        eye = (jax.lax.broadcasted_iota(jnp.int32, (tile, tile), 0)
               == jax.lax.broadcasted_iota(jnp.int32, (tile, tile), 1))
        pos_sc[...] = jnp.sum(jnp.where(eye, s, 0.0), axis=-1, keepdims=True)

    # ---- online logsumexp update ----------------------------------------------
    def _online_update(sv, bad):
        m_prev = m_sc[...]
        m_new = jnp.maximum(m_prev, jnp.max(sv, axis=-1, keepdims=True))
        alpha = jnp.exp(m_prev - m_new)               # == 0 while m_prev is -1e30
        p = jnp.exp(sv - m_new)
        if bad is not None:
            p = jnp.where(bad, 0.0, p)                # masked entries contribute 0
        l_sc[...] = alpha * l_sc[...] + jnp.sum(p, axis=-1, keepdims=True)
        m_sc[...] = m_new

    # Masking is only needed on diagonal tiles (self-similarity) and, if rows
    # were padded, on the tiles holding padded columns.
    needs_mask = i == j
    if has_pad:
        needs_mask = needs_mask | (
            ((j >= first_pad_tile) & (j < half)) | (j >= half + first_pad_tile))

    @pl.when(needs_mask)
    def _():
        row_g = i * tile + jax.lax.broadcasted_iota(jnp.int32, (tile, tile), 0)
        col_g = j * tile + jax.lax.broadcasted_iota(jnp.int32, (tile, tile), 1)
        bad = row_g == col_g
        if has_pad:
            bad = bad | ((col_g >= batch) & (col_g < bp)) | (col_g >= bp + batch)
        _online_update(jnp.where(bad, _NEG_BIG, s), bad)

    @pl.when(jnp.logical_not(needs_mask))
    def _():
        _online_update(s, None)

    # ---- finalize: loss_r = logsumexp(row \ diag) - positive_r ----------------
    @pl.when(j == n_col - 1)
    def _():
        per_row = (m_sc[...] + jnp.log(l_sc[...])) - pos_sc[...]   # (tile, 1)
        if has_pad:
            r = i * tile + jax.lax.broadcasted_iota(jnp.int32, (tile, 1), 0)
            valid = (r < batch) | ((r >= bp) & (r < bp + batch))
            per_row = jnp.where(valid, per_row, 0.0)
        # Lane-dense (unmasked) store; wrapper reads column 0.
        o_ref[...] = jnp.broadcast_to(per_row, (per_row.shape[0], 128))


def simclr_loss(z_i, z_j, temperature, *, use_pallas=None,
                compute_dtype=jnp.bfloat16, k_resident=None):
    """SimCLR NT-Xent loss. z_i, z_j: (batch_size, embedding_dim)."""
    b, d = z_i.shape
    n = 2 * b

    # Small-problem fallback: kernel-launch / per-step overhead would dominate.
    if use_pallas is None:
        use_pallas = n * d >= (64 * 1024)
    if not use_pallas:
        return _simclr_loss_ref(z_i, z_j, temperature)

    tile = _choose_tile(b)
    bp = _round_up(b, tile)          # padded half-batch (multiple of tile)
    dp = _round_up(d, 128)           # lane-aligned embedding dim
    n_p = 2 * bp
    n_tiles = n_p // tile
    has_pad = bp > b
    itemsize = jnp.dtype(compute_dtype).itemsize

    def _norm_pad(x):
        x = x.astype(jnp.float32)
        nrm = jnp.maximum(jnp.sqrt(jnp.sum(x * x, axis=-1, keepdims=True)), 1e-8)
        x = x / nrm                                       # L2 normalize once, in f32
        x = jnp.pad(x, ((0, bp - b), (0, dp - d)))
        return x.astype(compute_dtype)

    z = jnp.concatenate([_norm_pad(z_i), _norm_pad(z_j)], axis=0)   # (n_p, dp)

    # ---- VMEM budget (64 MiB/TC on v7x, 128 MiB on v5e/v6e) -------------------
    vmem_cap = _vmem_capacity_bytes()
    budget = (vmem_cap * 5) // 8                 # ~40 MiB on v7x, ~80 MiB on v5e/v6e
    fixed_bytes = (2 * tile * dp * itemsize      # q block, double-buffered
                   + 2 * tile * 128 * 4          # out block, double-buffered
                   + 4 * tile * 128 * 4          # (tile,1) scratches (lane-padded)
                   + (6 << 20))                  # sim tiles / spills / headroom
    resident_bytes = 2 * n_p * dp * itemsize     # allow for double buffering
    streamed_bytes = 2 * tile * dp * itemsize
    if k_resident is None:
        k_resident = fixed_bytes + resident_bytes <= budget
    kernel_bytes = fixed_bytes + (resident_bytes if k_resident else streamed_bytes)
    vmem_limit = int(min(max(kernel_bytes, 32 << 20), vmem_cap - (8 << 20)))

    kernel = functools.partial(
        _simclr_kernel, batch=b, bp=bp, tile=tile,
        inv_temp=float(1.0 / temperature),
        k_resident=bool(k_resident), has_pad=bool(has_pad))

    if k_resident:
        # Whole normalized z resident in VMEM: DMA'd once, sliced in-kernel.
        k_spec = pl.BlockSpec((n_p, dp), lambda i, j: (0, 0))
    else:
        # Streamed column tiles.
        k_spec = pl.BlockSpec((tile, dp), lambda i, j: (j, 0))

    grid_spec = pltpu.PrefetchScalarGridSpec(
        num_scalar_prefetch=0,
        grid=(n_tiles, n_tiles),
        in_specs=[
            pl.BlockSpec((tile, dp), lambda i, j: (i, 0)),   # row (q) tile
            k_spec,                                          # column operand
        ],
        out_specs=pl.BlockSpec((tile, 128), lambda i, j: (i, 0)),
        scratch_shapes=[
            pltpu.VMEM((tile, 1), jnp.float32),   # running row max
            pltpu.VMEM((tile, 1), jnp.float32),   # running row sum(exp)
            pltpu.VMEM((tile, 1), jnp.float32),   # positive logit
        ],
    )

    out = pl.pallas_call(
        kernel,
        out_shape=jax.ShapeDtypeStruct((n_p, 128), jnp.float32),
        grid_spec=grid_spec,
        compiler_params=pltpu.CompilerParams(
            dimension_semantics=("parallel", "arbitrary"),
            vmem_limit_bytes=vmem_limit,
        ),
        cost_estimate=pl.CostEstimate(
            flops=2 * n_p * n_p * dp,
            transcendentals=n_p * n_p,
            bytes_accessed=(itemsize * n_p * dp * (2 if k_resident else (1 + n_tiles))
                            + 4 * n_p * 128),
        ),
    )(z, z)

    # Padded rows were zeroed inside the kernel; divide by the original N.
    return jnp.sum(out[:, 0]) / jnp.float32(n)


def _simclr_loss_ref(z_i, z_j, temperature):
    """Pure-JAX reference mirroring the PyTorch module exactly."""
    b = z_i.shape[0]
    n = 2 * b
    z = jnp.concatenate([z_i, z_j], axis=0).astype(jnp.float32)
    norm = jnp.maximum(jnp.linalg.norm(z, axis=-1, keepdims=True), 1e-8)
    zn = z / norm
    sim = (zn @ zn.T) / temperature
    pos = jnp.concatenate(
        [jnp.diagonal(sim, offset=b), jnp.diagonal(sim, offset=-b)], axis=0)
    row = jnp.arange(n)[:, None]
    col = jnp.arange(n)[None, :]
    sim_masked = jnp.where(row == col, -1e30, sim)
    lse = jax.scipy.special.logsumexp(sim_masked, axis=-1)
    return jnp.sum(lse - pos) / n


if __name__ == "__main__":
    # NOTE: tot_neg in the PyTorch module is a host-side bookkeeping counter and
    # does not affect the returned loss; it is intentionally not reproduced.
    cases = [
        # (batch, dim, temp, use_pallas, compute_dtype, k_resident, atol, rtol)
        (8, 32, 0.5, None, jnp.bfloat16, None, 1e-5, 1e-5),    # small-N fallback path
        (8, 32, 0.5, True, jnp.float32, None, 2e-3, 2e-3),     # forced kernel, f32, heavy padding
        (12, 48, 0.2, True, jnp.bfloat16, None, 6e-2, 2e-2),   # forced kernel, bf16 + padding
        (192, 256, 0.5, None, jnp.bfloat16, None, 6e-2, 2e-2), # natural kernel path, resident k
        (192, 256, 0.5, True, jnp.bfloat16, False, 6e-2, 2e-2) # streamed-k path
    ]
    key = jax.random.PRNGKey(0)
    for (bsz, dim, temp, use_pallas, cdt, kres, atol, rtol) in cases:
        key, k1, k2 = jax.random.split(key, 3)
        z_i = jax.random.normal(k1, (bsz, dim), dtype=jnp.float32)
        z_j = jax.random.normal(k2, (bsz, dim), dtype=jnp.float32)

        loss = jax.block_until_ready(
            simclr_loss(z_i, z_j, temp, use_pallas=use_pallas,
                        compute_dtype=cdt, k_resident=kres))
        ref = _simclr_loss_ref(z_i, z_j, temp)
        assert jnp.isfinite(loss), (bsz, dim, float(loss))
        assert jnp.allclose(loss, ref, rtol=rtol, atol=atol), (
            bsz, dim, float(loss), float(ref))

    print("KERNEL_OK")
</pallas_src>

<mosaic_0001>
module attributes {stable_mosaic.version = 11 : i64} {
  func.func @_simclr_kernel(%arg0: i32, %arg1: i32, %arg2: memref<128x128xf32, #tpu.memory_space<vmem>>, %arg3: memref<256x128xf32, #tpu.memory_space<vmem>>, %arg4: memref<128x128xf32, #tpu.memory_space<vmem>>, %arg5: memref<128x1xf32, #tpu.memory_space<vmem>>, %arg6: memref<128x1xf32, #tpu.memory_space<vmem>>, %arg7: memref<128x1xf32, #tpu.memory_space<vmem>>) attributes {dimension_semantics = [#tpu.dimension_semantics<parallel>, #tpu.dimension_semantics<arbitrary>], iteration_bounds = array<i64: 2, 2>, scalar_prefetch = 0 : i64, scratch_operands = 3 : i64, tpu.core_type = #tpu.core_type<tc>, window_params = [{transform_indices = @transform_0, window_bounds = array<i64: 128, 128>}, {pipeline_mode = #tpu.pipeline_mode<synchronous>, transform_indices = @transform_1, window_bounds = array<i64: 256, 128>}, {transform_indices = @transform_2, window_bounds = array<i64: 128, 128>}]} {
    %c0_i32 = arith.constant 0 : i32
    %0 = arith.cmpi eq, %arg1, %c0_i32 : i32
    %1 = arith.extui %0 : i1 to i32
    %c0_i32_0 = arith.constant 0 : i32
    %2 = arith.cmpi ne, %1, %c0_i32_0 : i32
    scf.if %2 {
      %cst_17 = arith.constant -1.000000e+30 : f32
      %40 = vector.broadcast %cst_17 : f32 to vector<128x1xf32>
      %c0_18 = arith.constant 0 : index
      %c0_19 = arith.constant 0 : index
      %41 = vector.load %arg5[%c0_18, %c0_19] : memref<128x1xf32, #tpu.memory_space<vmem>>, vector<128x1xf32>
      tpu.vector_store %arg5[%c0_18, %c0_19], %40 {strides = array<i32>} : memref<128x1xf32, #tpu.memory_space<vmem>>, vector<128x1xf32>,
      %cst_20 = arith.constant 0.000000e+00 : f32
      %42 = vector.broadcast %cst_20 : f32 to vector<128x1xf32>
      %c0_21 = arith.constant 0 : index
      %c0_22 = arith.constant 0 : index
      %43 = vector.load %arg6[%c0_21, %c0_22] : memref<128x1xf32, #tpu.memory_space<vmem>>, vector<128x1xf32>
      tpu.vector_store %arg6[%c0_21, %c0_22], %42 {strides = array<i32>} : memref<128x1xf32, #tpu.memory_space<vmem>>, vector<128x1xf32>,
      %cst_23 = arith.constant 0.000000e+00 : f32
      %44 = vector.broadcast %cst_23 : f32 to vector<128x1xf32>
      %c0_24 = arith.constant 0 : index
      %c0_25 = arith.constant 0 : index
      %45 = vector.load %arg7[%c0_24, %c0_25] : memref<128x1xf32, #tpu.memory_space<vmem>>, vector<128x1xf32>
      tpu.vector_store %arg7[%c0_24, %c0_25], %44 {strides = array<i32>} : memref<128x1xf32, #tpu.memory_space<vmem>>, vector<128x1xf32>,
    } else {
    }
    %c128_i32 = arith.constant 128 : i32
    %3 = arith.muli %arg1, %c128_i32 : i32
    %4 = tpu.assume_multiple %3, 128 : i32
    %5 = arith.index_cast %4 : i32 to index
    %c0 = arith.constant 0 : index
    %6 = vector.load %arg3[%5, %c0] : memref<256x128xf32, #tpu.memory_space<vmem>>, vector<128x128xf32>
    %c0_1 = arith.constant 0 : index
    %c0_2 = arith.constant 0 : index
    %7 = vector.load %arg2[%c0_1, %c0_2] : memref<128x128xf32, #tpu.memory_space<vmem>>, vector<128x128xf32>
    %cst = arith.constant dense<0.000000e+00> : vector<128x128xf32>
    %8 = tpu.matmul %7, %6, %cst {dimension_numbers = #tpu.dot_dimension_numbers<[1], [1], [0], [0], [0, 0, 1, 0], [], []>} : vector<128x128xf32>, vector<128x128xf32>, vector<128x128xf32> -> vector<128x128xf32>
    %cst_3 = arith.constant 2.000000e+00 : f32
    %9 = vector.broadcast %cst_3 : f32 to vector<128x128xf32>
    %10 = arith.mulf %8, %9 : vector<128x128xf32>
    %c1_i32 = arith.constant 1 : i32
    %11 = arith.addi %arg0, %c1_i32 : i32
    %c2_i32 = arith.constant 2 : i32
    %c0_i32_4 = arith.constant 0 : i32
    %12 = arith.cmpi eq, %c2_i32, %c0_i32_4 : i32
    %c1_i32_5 = arith.constant 1 : i32
    %13 = arith.select %12, %c1_i32_5, %c2_i32 : i32
    %14 = arith.remsi %11, %13 : i32
    %c0_i32_6 = arith.constant 0 : i32
    %15 = arith.cmpi ne, %14, %c0_i32_6 : i32
    %c0_i32_7 = arith.constant 0 : i32
    %16 = arith.cmpi slt, %14, %c0_i32_7 : i32
    %c0_i32_8 = arith.constant 0 : i32
    %17 = arith.cmpi slt, %13, %c0_i32_8 : i32
    %18 = arith.xori %16, %17 : i1
    %19 = arith.andi %18, %15 : i1
    %20 = arith.addi %14, %13 : i32
    %21 = arith.select %19, %20, %14 : i32
    %22 = arith.cmpi eq, %arg1, %21 : i32
    %23 = arith.extui %22 : i1 to i32
    %c0_i32_9 = arith.constant 0 : i32
    %24 = arith.cmpi ne, %23, %c0_i32_9 : i32
    scf.if %24 {
      %40 = tpu.iota {dimensions = array<i32: 0>} : vector<128x128xi32>
      %41 = tpu.iota {dimensions = array<i32: 1>} : vector<128x128xi32>
      %42 = arith.cmpi eq, %40, %41 : vector<128x128xi32>
      %cst_17 = arith.constant 0.000000e+00 : f32
      %43 = vector.broadcast %cst_17 : f32 to vector<128x128xf32>
      %44 = arith.select %42, %10, %43 : vector<128x128xi1>, vector<128x128xf32>
      %cst_18 = arith.constant dense<0.000000e+00> : vector<128xf32>
      %45 = vector.multi_reduction <add>, %44, %cst_18 [1] : vector<128x128xf32> to vector<128xf32>
      %46 = vector.shape_cast %45 : vector<128xf32> to vector<128x1xf32>
      %c0_19 = arith.constant 0 : index
      %c0_20 = arith.constant 0 : index
      %47 = vector.load %arg7[%c0_19, %c0_20] : memref<128x1xf32, #tpu.memory_space<vmem>>, vector<128x1xf32>
      tpu.vector_store %arg7[%c0_19, %c0_20], %46 {strides = array<i32>} : memref<128x1xf32, #tpu.memory_space<vmem>>, vector<128x1xf32>,
    } else {
    }
    %25 = arith.cmpi eq, %arg0, %arg1 : i32
    %c0_i32_10 = arith.constant 0 : i32
    %26 = arith.cmpi sge, %arg1, %c0_i32_10 : i32
    %c1_i32_11 = arith.constant 1 : i32
    %27 = arith.cmpi slt, %arg1, %c1_i32_11 : i32
    %28 = arith.andi %26, %27 : i1
    %c1_i32_12 = arith.constant 1 : i32
    %29 = arith.cmpi sge, %arg1, %c1_i32_12 : i32
    %30 = arith.ori %28, %29 : i1
    %31 = arith.ori %25, %30 : i1
    %32 = arith.extui %31 : i1 to i32
    %c0_i32_13 = arith.constant 0 : i32
    %33 = arith.cmpi ne, %32, %c0_i32_13 : i32
    scf.if %33 {
      %c128_i32_17 = arith.constant 128 : i32
      %40 = arith.muli %arg0, %c128_i32_17 : i32
      %41 = tpu.iota {dimensions = array<i32: 0>} : vector<128x128xi32>
      %42 = vector.broadcast %40 : i32 to vector<128x128xi32>
      %43 = arith.addi %42, %41 : vector<128x128xi32>
      %c128_i32_18 = arith.constant 128 : i32
      %44 = arith.muli %arg1, %c128_i32_18 : i32
      %45 = tpu.iota {dimensions = array<i32: 1>} : vector<128x128xi32>
      %46 = vector.broadcast %44 : i32 to vector<128x128xi32>
      %47 = arith.addi %46, %45 : vector<128x128xi32>
      %48 = arith.cmpi eq, %43, %47 : vector<128x128xi32>
      %c8_i32 = arith.constant 8 : i32
      %49 = vector.broadcast %c8_i32 : i32 to vector<128x128xi32>
      %50 = arith.cmpi sge, %47, %49 : vector<128x128xi32>
      %c128_i32_19 = arith.constant 128 : i32
      %51 = vector.broadcast %c128_i32_19 : i32 to vector<128x128xi32>
      %52 = arith.cmpi slt, %47, %51 : vector<128x128xi32>
      %53 = arith.andi %50, %52 : vector<128x128xi1>
      %54 = arith.ori %48, %53 : vector<128x128xi1>
      %c136_i32 = arith.constant 136 : i32
      %55 = vector.broadcast %c136_i32 : i32 to vector<128x128xi32>
      %56 = arith.cmpi sge, %47, %55 : vector<128x128xi32>
      %57 = arith.ori %54, %56 : vector<128x128xi1>
      %cst_20 = arith.constant -1.000000e+30 : f32
      %58 = vector.broadcast %cst_20 : f32 to vector<128x128xf32>
      %59 = arith.select %57, %58, %10 : vector<128x128xi1>, vector<128x128xf32>
      %c0_21 = arith.constant 0 : index
      %c0_22 = arith.constant 0 : index
      %60 = vector.load %arg5[%c0_21, %c0_22] : memref<128x1xf32, #tpu.memory_space<vmem>>, vector<128x1xf32>
      %cst_23 = arith.constant dense<0xFF800000> : vector<128xf32>
      %61 = vector.multi_reduction <maximumf>, %59, %cst_23 [1] : vector<128x128xf32> to vector<128xf32>
      %62 = vector.shape_cast %61 : vector<128xf32> to vector<128x1xf32>
      %63 = arith.maximumf %60, %62 : vector<128x1xf32>
      %64 = arith.subf %60, %63 : vector<128x1xf32>
      %65 = math.exp %64 : vector<128x1xf32>
      %66 = vector.broadcast %63 : vector<128x1xf32> to vector<128x128xf32>
      %67 = arith.subf %59, %66 : vector<128x128xf32>
      %68 = math.exp %67 : vector<128x128xf32>
      %cst_24 = arith.constant 0.000000e+00 : f32
      %69 = vector.broadcast %cst_24 : f32 to vector<128x128xf32>
      %70 = arith.select %57, %69, %68 : vector<128x128xi1>, vector<128x128xf32>
      %c0_25 = arith.constant 0 : index
      %c0_26 = arith.constant 0 : index
      %71 = vector.load %arg6[%c0_25, %c0_26] : memref<128x1xf32, #tpu.memory_space<vmem>>, vector<128x1xf32>
      %72 = arith.mulf %65, %71 : vector<128x1xf32>
      %cst_27 = arith.constant dense<0.000000e+00> : vector<128xf32>
      %73 = vector.multi_reduction <add>, %70, %cst_27 [1] : vector<128x128xf32> to vector<128xf32>
      %74 = vector.shape_cast %73 : vector<128xf32> to vector<128x1xf32>
      %75 = arith.addf %72, %74 : vector<128x1xf32>
      %c0_28 = arith.constant 0 : index
      %c0_29 = arith.constant 0 : index
      %76 = vector.load %arg6[%c0_28, %c0_29] : memref<128x1xf32, #tpu.memory_space<vmem>>, vector<128x1xf32>
      tpu.vector_store %arg6[%c0_28, %c0_29], %75 {strides = array<i32>} : memref<128x1xf32, #tpu.memory_space<vmem>>, vector<128x1xf32>,
      %c0_30 = arith.constant 0 : index
      %c0_31 = arith.constant 0 : index
      %77 = vector.load %arg5[%c0_30, %c0_31] : memref<128x1xf32, #tpu.memory_space<vmem>>, vector<128x1xf32>
      tpu.vector_store %arg5[%c0_30, %c0_31], %63 {strides = array<i32>} : memref<128x1xf32, #tpu.memory_space<vmem>>, vector<128x1xf32>,
    } else {
    }
    %true = arith.constant true
    %34 = arith.xori %31, %true : i1
    %35 = arith.extui %34 : i1 to i32
    %c0_i32_14 = arith.constant 0 : i32
    %36 = arith.cmpi ne, %35, %c0_i32_14 : i32
    scf.if %36 {
      %c0_17 = arith.constant 0 : index
      %c0_18 = arith.constant 0 : index
      %40 = vector.load %arg5[%c0_17, %c0_18] : memref<128x1xf32, #tpu.memory_space<vmem>>, vector<128x1xf32>
      %cst_19 = arith.constant dense<0xFF800000> : vector<128xf32>
      %41 = vector.multi_reduction <maximumf>, %10, %cst_19 [1] : vector<128x128xf32> to vector<128xf32>
      %42 = vector.shape_cast %41 : vector<128xf32> to vector<128x1xf32>
      %43 = arith.maximumf %40, %42 : vector<128x1xf32>
      %44 = arith.subf %40, %43 : vector<128x1xf32>
      %45 = math.exp %44 : vector<128x1xf32>
      %46 = vector.broadcast %43 : vector<128x1xf32> to vector<128x128xf32>
      %47 = arith.subf %10, %46 : vector<128x128xf32>
      %48 = math.exp %47 : vector<128x128xf32>
      %c0_20 = arith.constant 0 : index
      %c0_21 = arith.constant 0 : index
      %49 = vector.load %arg6[%c0_20, %c0_21] : memref<128x1xf32, #tpu.memory_space<vmem>>, vector<128x1xf32>
      %50 = arith.mulf %45, %49 : vector<128x1xf32>
      %cst_22 = arith.constant dense<0.000000e+00> : vector<128xf32>
      %51 = vector.multi_reduction <add>, %48, %cst_22 [1] : vector<128x128xf32> to vector<128xf32>
      %52 = vector.shape_cast %51 : vector<128xf32> to vector<128x1xf32>
      %53 = arith.addf %50, %52 : vector<128x1xf32>
      %c0_23 = arith.constant 0 : index
      %c0_24 = arith.constant 0 : index
      %54 = vector.load %arg6[%c0_23, %c0_24] : memref<128x1xf32, #tpu.memory_space<vmem>>, vector<128x1xf32>
      tpu.vector_store %arg6[%c0_23, %c0_24], %53 {strides = array<i32>} : memref<128x1xf32, #tpu.memory_space<vmem>>, vector<128x1xf32>,
      %c0_25 = arith.constant 0 : index
      %c0_26 = arith.constant 0 : index
      %55 = vector.load %arg5[%c0_25, %c0_26] : memref<128x1xf32, #tpu.memory_space<vmem>>, vector<128x1xf32>
      tpu.vector_store %arg5[%c0_25, %c0_26], %43 {strides = array<i32>} : memref<128x1xf32, #tpu.memory_space<vmem>>, vector<128x1xf32>,
    } else {
    }
    %c1_i32_15 = arith.constant 1 : i32
    %37 = arith.cmpi eq, %arg1, %c1_i32_15 : i32
    %38 = arith.extui %37 : i1 to i32
    %c0_i32_16 = arith.constant 0 : i32
    %39 = arith.cmpi ne, %38, %c0_i32_16 : i32
    scf.if %39 {
      %c0_17 = arith.constant 0 : index
      %c0_18 = arith.constant 0 : index
      %40 = vector.load %arg5[%c0_17, %c0_18] : memref<128x1xf32, #tpu.memory_space<vmem>>, vector<128x1xf32>
      %c0_19 = arith.constant 0 : index
      %c0_20 = arith.constant 0 : index
      %41 = vector.load %arg6[%c0_19, %c0_20] : memref<128x1xf32, #tpu.memory_space<vmem>>, vector<128x1xf32>
      %42 = math.log %41 : vector<128x1xf32>
      %43 = arith.addf %40, %42 : vector<128x1xf32>
      %c0_21 = arith.constant 0 : index
      %c0_22 = arith.constant 0 : index
      %44 = vector.load %arg7[%c0_21, %c0_22] : memref<128x1xf32, #tpu.memory_space<vmem>>, vector<128x1xf32>
      %45 = arith.subf %43, %44 : vector<128x1xf32>
      %c128_i32_23 = arith.constant 128 : i32
      %46 = arith.muli %arg0, %c128_i32_23 : i32
      %47 = tpu.iota {dimensions = array<i32: 0>} : vector<128x1xi32>
      %48 = vector.broadcast %46 : i32 to vector<128x1xi32>
      %49 = arith.addi %48, %47 : vector<128x1xi32>
      %c8_i32 = arith.constant 8 : i32
      %50 = vector.broadcast %c8_i32 : i32 to vector<128x1xi32>
      %51 = arith.cmpi slt, %49, %50 : vector<128x1xi32>
      %c128_i32_24 = arith.constant 128 : i32
      %52 = vector.broadcast %c128_i32_24 : i32 to vector<128x1xi32>
      %53 = arith.cmpi sge, %49, %52 : vector<128x1xi32>
      %c136_i32 = arith.constant 136 : i32
      %54 = vector.broadcast %c136_i32 : i32 to vector<128x1xi32>
      %55 = arith.cmpi slt, %49, %54 : vector<128x1xi32>
      %56 = arith.andi %53, %55 : vector<128x1xi1>
      %57 = arith.ori %51, %56 : vector<128x1xi1>
      %cst_25 = arith.constant 0.000000e+00 : f32
      %58 = vector.broadcast %cst_25 : f32 to vector<128x1xf32>
      %59 = arith.select %57, %45, %58 : vector<128x1xi1>, vector<128x1xf32>
      %60 = vector.shape_cast %59 : vector<128x1xf32> to vector<128x1xf32>
      %61 = vector.broadcast %60 : vector<128x1xf32> to vector<128x128xf32>
      %c0_26 = arith.constant 0 : index
      %c0_27 = arith.constant 0 : index
      %62 = vector.load %arg4[%c0_26, %c0_27] : memref<128x128xf32, #tpu.memory_space<vmem>>, vector<128x128xf32>
      tpu.vector_store %arg4[%c0_26, %c0_27], %61 {strides = array<i32>} : memref<128x128xf32, #tpu.memory_space<vmem>>, vector<128x128xf32>,
    } else {
    }
    return
  }
  func.func @transform_0(%arg0: i32, %arg1: i32) -> (i32, i32) {
    %c0_i32 = arith.constant 0 : i32
    %c0_i32_0 = arith.constant 0 : i32
    return %arg0, %c0_i32 : i32, i32
  }
  func.func @transform_1(%arg0: i32, %arg1: i32) -> (i32, i32) {
    %c0_i32 = arith.constant 0 : i32
    %c0_i32_0 = arith.constant 0 : i32
    %c0_i32_1 = arith.constant 0 : i32
    return %c0_i32, %c0_i32_0 : i32, i32
  }
  func.func @transform_2(%arg0: i32, %arg1: i32) -> (i32, i32) {
    %c0_i32 = arith.constant 0 : i32
    %c0_i32_0 = arith.constant 0 : i32
    return %arg0, %c0_i32 : i32, i32
  }
}

</mosaic_0001>

<llo_original>
// kernel: tpu_custom_call.1
$region0: #{tpu_custom_call.1}
  #allocation0 [shape = 'u32[]', space=smem, size = 0x4, offset = 0x4, fixed_abs, tag = 'smem constant byte address 0x4 - core index']
  #allocation1 [shape = 'u32[144,128]{1,0:T(1,128)}', space=vmem, size = 0x12000, scoped, tag = 'internal scratch']
  #allocation2 [shape = 'f32[128,1]{1,0:T(8,128)}', space=vmem, size = 0x10000, scoped, tag = 'scratch operand']
  #allocation3 [shape = 'f32[128,1]{1,0:T(8,128)}', space=vmem, size = 0x10000, scoped, tag = 'scratch operand']
  #allocation4 [shape = 'f32[128,1]{1,0:T(8,128)}', space=vmem, size = 0x10000, scoped, tag = 'scratch operand']
  %s0 = inlined_call_operand.hbm [shape: f32[256,128], index: 0, kind: input, shape index: {}]
  %s1 = inlined_call_operand.hbm [shape: f32[256,128], index: 1, kind: input, shape index: {}]
  %s2 = inlined_call_operand.hbm [shape: f32[256,128], index: 2, kind: output, shape index: {}]
  %s3 = sld [smem:[#allocation0]]
  $region69: #{tpu_custom_call.1} parent=0
    _
  %s5 = ssub.s32 1, %s3
  %s6 = scalar_select 0, %s5, %s3
  $region1: #{tpu_custom_call.1} parent=0
    #allocation5 [shape = 'u8[131072]{0}', space=vmem, size = 0x20000, scoped, tag = 'input window, operand 0']
    #allocation6 [shape = 's32[2]{0}', space=sflag, size = 0x8, scoped, tag = 'scoped memory for tpu_custom_call.1']
    #allocation7 [shape = 's32[2]{0}', space=sflag, size = 0x8, scoped, tag = 'scoped memory for tpu_custom_call.1']
    #allocation8 [shape = 'u8[131072]{0}', space=vmem, size = 0x20000, scoped, tag = 'input window, operand 1, single buffered']
    #allocation9 [shape = 's32[1]{0}', space=sflag, size = 0x4, scoped, tag = 'scoped memory for tpu_custom_call.1']
    #allocation10 [shape = 'u8[131072]{0}', space=vmem, size = 0x20000, scoped, tag = 'output window, operand 0']
    %7 = vsyncpa [#allocation6], 0
    %s8 = scalar_lea.sflag [#allocation6], 1
    %9 = vsyncpa %s8, 0
    %10 = vsyncpa [#allocation9], 0
    %11 = vsyncpa [#allocation7], 0
    %s12 = scalar_lea.sflag [#allocation7], 1
    %13 = vsyncpa %s12, 0
    loop: start=0, step=1, limit=6
    $region2: #{tpu_custom_call.1} parent=1 // loop_pre_header
      _
    $region3: #{tpu_custom_call.1} parent=1 // loop_header
      %s15 = sphi 0, %s19
      %p16 = scmp.ge.s32.totalorder %s15, 6
      %s22 = sphi 0, %s34
      %s23 = sphi 0, %s30
      %s24 = sphi 0, %s22
      %s25 = sphi 0, %s23
      %s26 = sphi 0, %s24
      %s27 = sphi 0, %s25
      %s37 = sphi 0, %s39
      %s40 = sphi 0, %s37
      %s41 = sphi 0, %s40
      %s57 = sphi 0, %s41
      %s61 = sphi 0, %s61
      %s63 = sphi 0, %s61
      %s64 = sphi 0, %s63
      %s78 = sphi 0, %s64
      %s84 = sphi 0, %s86
      %s87 = sphi 0, %s84
      %s88 = sphi 0, %s87
      %s104 = sphi 0, %s88
    $region4: #{tpu_custom_call.1} parent=1 // loop_header_branch
      %18 = sbr.rel (%p16) target = $region8
    $region5: #{tpu_custom_call.1} parent=1 // loop_body
      %s20 = ssub.s32 %s15, 1
      %s21 = ssub.s32 %s15, 2
      %s28 = sadd.s32 1, %s23
      %p29 = scmp.ge.s32.totalorder %s28, 2
      %s30 = scalar_select %p29, 0, %s28
      %s31 = sadd.s32 1, %s22
      %s32 = scalar_select %p29, %s31, %s22
      %p33 = scmp.ge.s32.totalorder %s32, 2
      %s34 = scalar_select %p33, 0, %s32
      %s35 = ssub.s32 %s22, %s34
      %p36 = scmp.eq.s32.totalorder %s35, 0
      %s38 = sadd.s32 %s37, 1
      %s39 = scalar_select %p36, %s37, %s38
      %p42 = pneg %p36
      %p43 = scmp.eq.s32.totalorder %s15, 3
      %p44 = por %p42, %p43
      %p45 = scmp.ne.s32.totalorder %s37, %s40
      %p46 = scmp.eq.s32.totalorder %s15, 0
      %p47 = por %p45, %p46
      %p48 = scmp.ne.s32.totalorder %s37, %s40
      %p49 = scmp.eq.s32.totalorder %s20, 3
      %p50 = por %p48, %p49
      %p51 = scmp.ne.s32.totalorder %s40, %s41
      %p52 = scmp.eq.s32.totalorder %s20, 0
      %p53 = por %p51, %p52
      %p54 = scmp.ne.s32.totalorder %s40, %s41
      %p55 = scmp.eq.s32.totalorder %s21, 3
      %p56 = por %p54, %p55
      %p58 = scmp.ne.s32.totalorder %s41, %s57
      %p59 = scmp.eq.s32.totalorder %s21, 0
      %p60 = por %p58, %p59
      %s62 = sadd.s32 %s61, 1
      %p65 = scmp.eq.s32.totalorder %s15, 3
      %p66 = scmp.ne.s32.totalorder %s61, %s63
      %p67 = scmp.eq.s32.totalorder %s15, 0
      %p68 = por %p66, %p67
      %p69 = scmp.ne.s32.totalorder %s61, %s63
      %p70 = scmp.eq.s32.totalorder %s20, 3
      %p71 = por %p69, %p70
      %p72 = scmp.ne.s32.totalorder %s63, %s64
      %p73 = scmp.eq.s32.totalorder %s20, 0
      %p74 = por %p72, %p73
      %p75 = scmp.ne.s32.totalorder %s63, %s64
      %p76 = scmp.eq.s32.totalorder %s21, 3
      %p77 = por %p75, %p76
      %p79 = scmp.ne.s32.totalorder %s64, %s78
      %p80 = scmp.eq.s32.totalorder %s21, 0
      %p81 = por %p79, %p80
      %s82 = ssub.s32 %s22, %s34
      %p83 = scmp.eq.s32.totalorder %s82, 0
      %s85 = sadd.s32 %s84, 1
      %s86 = scalar_select %p83, %s84, %s85
      %p89 = pneg %p83
      %p90 = scmp.eq.s32.totalorder %s15, 3
      %p91 = por %p89, %p90
      %p92 = scmp.ne.s32.totalorder %s84, %s87
      %p93 = scmp.eq.s32.totalorder %s15, 0
      %p94 = por %p92, %p93
      %p95 = scmp.ne.s32.totalorder %s84, %s87
      %p96 = scmp.eq.s32.totalorder %s20, 3
      %p97 = por %p95, %p96
      %p98 = scmp.ne.s32.totalorder %s87, %s88
      %p99 = scmp.eq.s32.totalorder %s20, 0
      %p100 = por %p98, %p99
      %p101 = scmp.ne.s32.totalorder %s87, %s88
      %p102 = scmp.eq.s32.totalorder %s21, 3
      %p103 = por %p101, %p102
      %p105 = scmp.ne.s32.totalorder %s88, %s104
      %p106 = scmp.eq.s32.totalorder %s21, 0
      %p107 = por %p105, %p106
      %p108 = scmp.le.s32.totalorder 1, %s15
      %p109 = scmp.lt.s32.totalorder %s15, 5
      %p110 = pnand %p108, %p109
      %p111 = pneg %p110
      // Predicated region
      $region9: #{tpu_custom_call.1} parent=5 // pred_check
        _
      $region10: #{tpu_custom_call.1} parent=5 // pred_check_branch
        %113 = sbr.rel (%p110) target = $region12
      $region11: #{tpu_custom_call.1} parent=5 // pred_region
        %s114 = ssub.s32 %s15, 1
        // Predicated region
        $region13: #{tpu_custom_call.1} parent=11 // pred_check
          %p115 = pneg %p74
        $region14: #{tpu_custom_call.1} parent=11 // pred_check_branch
          %117 = sbr.rel (%p115) target = $region16
        $region15: #{tpu_custom_call.1} parent=11 // pred_region
          %s119 = ssub.s32 4096, 4096
          %120 = vsyncadd [#allocation9], %s119
          %s121 = sshll.u32 [#allocation8], 4
          %s122 = int_to_ptr.vmem [resolvable:$true] %s121
          %127 = dma.hbm_to_vmem [thread:$0]  %s1, 4096, %s122, [#allocation9], 128, 128, 8
        $region16: #{tpu_custom_call.1} parent=11 // pred_fallthru
          _
      $region12: #{tpu_custom_call.1} parent=5 // pred_fallthru
        _
      %p128 = scmp.lt.s32.totalorder %s15, 4
      // Predicated region
      $region17: #{tpu_custom_call.1} parent=5 // pred_check
        %p129 = pneg %p128
      $region18: #{tpu_custom_call.1} parent=5 // pred_check_branch
        %131 = sbr.rel (%p129) target = $region20
      $region19: #{tpu_custom_call.1} parent=5 // pred_region
        // Predicated region
        $region21: #{tpu_custom_call.1} parent=19 // pred_check
          %p132 = pneg %p47
        $region22: #{tpu_custom_call.1} parent=19 // pred_check_branch
          %134 = sbr.rel (%p132) target = $region24
        $region23: #{tpu_custom_call.1} parent=19 // pred_region
          %s135 = sand.u32 %s37, 1
          %s136 = scalar_lea.sflag [#allocation6], %s135
          %s137 = sand.u32 %s37, 1
          %s138 = smul.addr %s137, 128
          %s139 = scalar_lea.vmem [#allocation5], %s138
          %s140 = smul.u32 16, %s22
          %s142 = ssub.s32 2048, 2048
          %143 = vsyncadd %s136, %s142
          %s144 = smul.addr %s140, 128
          %s145 = scalar_lea.hbm %s0, %s144
          %s146 = sshll.u32 %s139, 4
          %s147 = int_to_ptr.vmem [resolvable:$true] %s146
          %152 = dma.hbm_to_vmem [thread:$0]  %s145, 2048, %s147, %s136, 128, 128, 8
        $region24: #{tpu_custom_call.1} parent=19 // pred_fallthru
          _
      $region20: #{tpu_custom_call.1} parent=5 // pred_fallthru
        _
      %p153 = scmp.le.s32.totalorder 1, %s15
      %p154 = scmp.lt.s32.totalorder %s15, 5
      %p155 = pnand %p153, %p154
      %p156 = pneg %p155
      // Predicated region
      $region25: #{tpu_custom_call.1} parent=5 // pred_check
        _
      $region26: #{tpu_custom_call.1} parent=5 // pred_check_branch
        %158 = sbr.rel (%p155) target = $region28
      $region27: #{tpu_custom_call.1} parent=5 // pred_region
        %s159 = ssub.s32 %s15, 1
        %s160 = sand.u32 %s40, 1
        %s161 = scalar_lea.sflag [#allocation6], %s160
        %s162 = sand.u32 %s40, 1
        %s163 = smul.addr %s162, 128
        %s164 = scalar_lea.vmem [#allocation5], %s163
        // Predicated region
        $region29: #{tpu_custom_call.1} parent=27 // pred_check
          %p165 = pneg %p53
        $region30: #{tpu_custom_call.1} parent=27 // pred_check_branch
          %167 = sbr.rel (%p165) target = $region32
        $region31: #{tpu_custom_call.1} parent=27 // pred_region
          %168 = dma.done %s161, 2048
        $region32: #{tpu_custom_call.1} parent=27 // pred_fallthru
          _
        // Predicated region
        $region33: #{tpu_custom_call.1} parent=27 // pred_check
          %p169 = pneg %p74
        $region34: #{tpu_custom_call.1} parent=27 // pred_check_branch
          %171 = sbr.rel (%p169) target = $region36
        $region35: #{tpu_custom_call.1} parent=27 // pred_region
          %172 = dma.done [#allocation9], 4096
        $region36: #{tpu_custom_call.1} parent=27 // pred_fallthru
          _
        %s173 = sand.u32 %s40, 1
        %s174 = scalar_lea.sflag [#allocation6], %s173
        %s175 = sand.u32 %s40, 1
        %s176 = smul.addr %s175, 128
        %s177 = scalar_lea.vmem [#allocation5], %s176
        %p178 = pneg %p53
        %p179 = pneg %p50
        %p180 = pneg %p74
        %p181 = pneg %p71
        %p182 = pneg %p100
        %p183 = pneg %p97
        %s184 = sand.u32 %s87, 1
        %s185 = scalar_lea.sflag [#allocation7], %s184
        %s186 = sand.u32 %s87, 1
        %s187 = smul.addr %s186, 128
        %s188 = scalar_lea.vmem [#allocation10], %s187
        %s189 = smul.u32 16, %s24
        %s190 = smul.u32 16, %s24
        %p191 = scmp.eq.s32.totalorder %s25, 0
        // Predicated region
        $region37: #{tpu_custom_call.1} parent=27 // pred_check
          %p192 = pneg %p191
        $region38: #{tpu_custom_call.1} parent=27 // pred_check_branch
          %194 = sbr.rel (%p192) target = $region40
        $region39: #{tpu_custom_call.1} parent=27 // pred_region
          %vm195 = vcmask 7168
          %196 = vst.msk [vmem:[#allocation2] sm:$0xff] %vm195, -1e+30
          %197 = vst.msk [vmem:[#allocation2 + $0x8] sm:$0xff] %vm195, -1e+30
          %198 = vst.msk [vmem:[#allocation2 + $0x10] sm:$0xff] %vm195, -1e+30
          %199 = vst.msk [vmem:[#allocation2 + $0x18] sm:$0xff] %vm195, -1e+30
          %200 = vst.msk [vmem:[#allocation2 + $0x20] sm:$0xff] %vm195, -1e+30
          %201 = vst.msk [vmem:[#allocation2 + $0x28] sm:$0xff] %vm195, -1e+30
          %202 = vst.msk [vmem:[#allocation2 + $0x30] sm:$0xff] %vm195, -1e+30
          %203 = vst.msk [vmem:[#allocation2 + $0x38] sm:$0xff] %vm195, -1e+30
          %204 = vst.msk [vmem:[#allocation2 + $0x40] sm:$0xff] %vm195, -1e+30
          %205 = vst.msk [vmem:[#allocation2 + $0x48] sm:$0xff] %vm195, -1e+30
          %206 = vst.msk [vmem:[#allocation2 + $0x50] sm:$0xff] %vm195, -1e+30
          %207 = vst.msk [vmem:[#allocation2 + $0x58] sm:$0xff] %vm195, -1e+30
          %208 = vst.msk [vmem:[#allocation2 + $0x60] sm:$0xff] %vm195, -1e+30
          %209 = vst.msk [vmem:[#allocation2 + $0x68] sm:$0xff] %vm195, -1e+30
          %210 = vst.msk [vmem:[#allocation2 + $0x70] sm:$0xff] %vm195, -1e+30
          %211 = vst.msk [vmem:[#allocation2 + $0x78] sm:$0xff] %vm195, -1e+30
          %212 = vst.msk [vmem:[#allocation3] sm:$0xff] %vm195, 0.0
          %213 = vst.msk [vmem:[#allocation3 + $0x8] sm:$0xff] %vm195, 0.0
          %214 = vst.msk [vmem:[#allocation3 + $0x10] sm:$0xff] %vm195, 0.0
          %215 = vst.msk [vmem:[#allocation3 + $0x18] sm:$0xff] %vm195, 0.0
          %216 = vst.msk [vmem:[#allocation3 + $0x20] sm:$0xff] %vm195, 0.0
          %217 = vst.msk [vmem:[#allocation3 + $0x28] sm:$0xff] %vm195, 0.0
          %218 = vst.msk [vmem:[#allocation3 + $0x30] sm:$0xff] %vm195, 0.0
          %219 = vst.msk [vmem:[#allocation3 + $0x38] sm:$0xff] %vm195, 0.0
          %220 = vst.msk [vmem:[#allocation3 + $0x40] sm:$0xff] %vm195, 0.0
          %221 = vst.msk [vmem:[#allocation3 + $0x48] sm:$0xff] %vm195, 0.0
          %222 = vst.msk [vmem:[#allocation3 + $0x50] sm:$0xff] %vm195, 0.0
          %223 = vst.msk [vmem:[#allocation3 + $0x58] sm:$0xff] %vm195, 0.0
          %224 = vst.msk [vmem:[#allocation3 + $0x60] sm:$0xff] %vm195, 0.0
          %225 = vst.msk [vmem:[#allocation3 + $0x68] sm:$0xff] %vm195, 0.0
          %226 = vst.msk [vmem:[#allocation3 + $0x70] sm:$0xff] %vm195, 0.0
          %227 = vst.msk [vmem:[#allocation3 + $0x78] sm:$0xff] %vm195, 0.0
          %228 = vst.msk [vmem:[#allocation4] sm:$0xff] %vm195, 0.0
          %229 = vst.msk [vmem:[#allocation4 + $0x8] sm:$0xff] %vm195, 0.0
          %230 = vst.msk [vmem:[#allocation4 + $0x10] sm:$0xff] %vm195, 0.0
          %231 = vst.msk [vmem:[#allocation4 + $0x18] sm:$0xff] %vm195, 0.0
          %232 = vst.msk [vmem:[#allocation4 + $0x20] sm:$0xff] %vm195, 0.0
          %233 = vst.msk [vmem:[#allocation4 + $0x28] sm:$0xff] %vm195, 0.0
          %234 = vst.msk [vmem:[#allocation4 + $0x30] sm:$0xff] %vm195, 0.0
          %235 = vst.msk [vmem:[#allocation4 + $0x38] sm:$0xff] %vm195, 0.0
          %236 = vst.msk [vmem:[#allocation4 + $0x40] sm:$0xff] %vm195, 0.0
          %237 = vst.msk [vmem:[#allocation4 + $0x48] sm:$0xff] %vm195, 0.0
          %238 = vst.msk [vmem:[#allocation4 + $0x50] sm:$0xff] %vm195, 0.0
          %239 = vst.msk [vmem:[#allocation4 + $0x58] sm:$0xff] %vm195, 0.0
          %240 = vst.msk [vmem:[#allocation4 + $0x60] sm:$0xff] %vm195, 0.0
          %241 = vst.msk [vmem:[#allocation4 + $0x68] sm:$0xff] %vm195, 0.0
          %242 = vst.msk [vmem:[#allocation4 + $0x70] sm:$0xff] %vm195, 0.0
          %243 = vst.msk [vmem:[#allocation4 + $0x78] sm:$0xff] %vm195, 0.0
        $region40: #{tpu_custom_call.1} parent=27 // pred_fallthru
          _
        %s244 = smul.u32 %s25, 128
        %s245 = scalar_lea.vmem [#allocation8], %s244
        %v246 = vld [vmem:[%s245] sm:$0xff]
        %v247 = vld [vmem:[%s245 + $0x8] sm:$0xff]
        %v248 = vld [vmem:[%s245 + $0x10] sm:$0xff]
        %v249 = vld [vmem:[%s245 + $0x18] sm:$0xff]
        %v250 = vld [vmem:[%s245 + $0x20] sm:$0xff]
        %v251 = vld [vmem:[%s245 + $0x28] sm:$0xff]
        %v252 = vld [vmem:[%s245 + $0x30] sm:$0xff]
        %v253 = vld [vmem:[%s245 + $0x38] sm:$0xff]
        %v254 = vld [vmem:[%s245 + $0x40] sm:$0xff]
        %v255 = vld [vmem:[%s245 + $0x48] sm:$0xff]
        %v256 = vld [vmem:[%s245 + $0x50] sm:$0xff]
        %v257 = vld [vmem:[%s245 + $0x58] sm:$0xff]
        %v258 = vld [vmem:[%s245 + $0x60] sm:$0xff]
        %v259 = vld [vmem:[%s245 + $0x68] sm:$0xff]
        %v260 = vld [vmem:[%s245 + $0x70] sm:$0xff]
        %v261 = vld [vmem:[%s245 + $0x78] sm:$0xff]
        %v262 = vld [vmem:[%s164] sm:$0xff]
        %v263 = vld [vmem:[%s164 + $0x8] sm:$0xff]
        %v264 = vld [vmem:[%s164 + $0x10] sm:$0xff]
        %v265 = vld [vmem:[%s164 + $0x18] sm:$0xff]
        %v266 = vld [vmem:[%s164 + $0x20] sm:$0xff]
        %v267 = vld [vmem:[%s164 + $0x28] sm:$0xff]
        %v268 = vld [vmem:[%s164 + $0x30] sm:$0xff]
        %v269 = vld [vmem:[%s164 + $0x38] sm:$0xff]
        %v270 = vld [vmem:[%s164 + $0x40] sm:$0xff]
        %v271 = vld [vmem:[%s164 + $0x48] sm:$0xff]
        %v272 = vld [vmem:[%s164 + $0x50] sm:$0xff]
        %v273 = vld [vmem:[%s164 + $0x58] sm:$0xff]
        %v274 = vld [vmem:[%s164 + $0x60] sm:$0xff]
        %v275 = vld [vmem:[%s164 + $0x68] sm:$0xff]
        %v276 = vld [vmem:[%s164 + $0x70] sm:$0xff]
        %v277 = vld [vmem:[%s164 + $0x78] sm:$0xff]
        %278 = vmatprep.subr.mxu0 0.0
        %279 = vmatpush1.xpose.msra.mxu0 %v246
        %280 = vmatprep.subr.mxu0 0.0
        %281 = vmatpush1.xpose.msra.mxu0 %v247
        %282 = vmatprep.subr.mxu0 0.0
        %283 = vmatpush1.xpose.msra.mxu0 %v248
        %284 = vmatprep.subr.mxu0 0.0
        %285 = vmatpush1.xpose.msra.mxu0 %v249
        %286 = vmatprep.subr.mxu0 0.0
        %287 = vmatpush1.xpose.msra.mxu0 %v250
        %288 = vmatprep.subr.mxu0 0.0
        %289 = vmatpush1.xpose.msra.mxu0 %v251
        %290 = vmatprep.subr.mxu0 0.0
        %291 = vmatpush1.xpose.msra.mxu0 %v252
        %292 = vmatprep.subr.mxu0 0.0
        %293 = vmatpush1.xpose.msra.mxu0 %v253
        %294 = vmatprep.subr.mxu0 0.0
        %295 = vmatpush1.xpose.msra.mxu0 %v254
        %296 = vmatprep.subr.mxu0 0.0
        %297 = vmatpush1.xpose.msra.mxu0 %v255
        %298 = vmatprep.subr.mxu0 0.0
        %299 = vmatpush1.xpose.msra.mxu0 %v256
        %300 = vmatprep.subr.mxu0 0.0
        %301 = vmatpush1.xpose.msra.mxu0 %v257
        %302 = vmatprep.subr.mxu0 0.0
        %303 = vmatpush1.xpose.msra.mxu0 %v258
        %304 = vmatprep.subr.mxu0 0.0
        %305 = vmatpush1.xpose.msra.mxu0 %v259
        %306 = vmatprep.subr.mxu0 0.0
        %307 = vmatpush1.xpose.msra.mxu0 %v260
        %308 = vmatprep.subr.mxu0 0.0
        %309 = vmatpush1.xpose.msra.mxu0 %v261
        %310 = vmatprep.subr.mxu0 0.0
        %311 = vmatpush1.xpose.msra.mxu0 0.0
        %312 = vmatprep.subr.mxu0 0.0
        %313 = vmatpush1.xpose.msra.mxu0 0.0
        %314 = vmatprep.subr.mxu0 0.0
        %315 = vmatpush1.xpose.msra.mxu0 0.0
        %316 = vmatprep.subr.mxu0 0.0
        %317 = vmatpush1.xpose.msra.mxu0 0.0
        %318 = vmatprep.subr.mxu0 0.0
        %319 = vmatpush1.xpose.msra.mxu0 0.0
        %320 = vmatprep.subr.mxu0 0.0
        %321 = vmatpush1.xpose.msra.mxu0 0.0
        %322 = vmatprep.subr.mxu0 0.0
        %323 = vmatpush1.xpose.msra.mxu0 0.0
        %324 = vmatprep.subr.mxu0 0.0
        %325 = vmatpush1.xpose.msra.mxu0 0.0
        %326 = vmatprep.subr.mxu0 0.0
        %327 = vmatpush1.xpose.msra.mxu0 0.0
        %328 = vmatprep.subr.mxu0 0.0
        %329 = vmatpush1.xpose.msra.mxu0 0.0
        %330 = vmatprep.subr.mxu0 0.0
        %331 = vmatpush1.xpose.msra.mxu0 0.0
        %332 = vmatprep.subr.mxu0 0.0
        %333 = vmatpush1.xpose.msra.mxu0 0.0
        %334 = vmatprep.subr.mxu0 0.0
        %335 = vmatpush1.xpose.msra.mxu0 0.0
        %336 = vmatprep.subr.mxu0 0.0
        %337 = vmatpush1.xpose.msra.mxu0 0.0
        %338 = vmatprep.subr.mxu0 0.0
        %339 = vmatpush1.xpose.msra.mxu0 0.0
        %340 = vmatprep.subr.mxu0 0.0
        %341 = vmatpush1.xpose.msra.mxu0 0.0
        %342 = vmatprep.mubr.f32.mxu0 0.0
        %343 = vmatmul.mubr.f32.gmra.mrb[0].mxu0 %v262
        %v344 = vpop.f32.mrb[0].mxu0
        %v345 = vadd.f32 0.0, %v344
        %v346 = vpop.f32.mrb[0].mxu0
        %347 = vmatprep.mubr.f32.mxu0 0.0
        %348 = vmatmul.mubr.f32.gmra.mrb[0].mxu0 %v263
        %v349 = vpop.f32.mrb[0].mxu0
        %v350 = vadd.f32 0.0, %v349
        %v351 = vpop.f32.mrb[0].mxu0
        %352 = vmatprep.mubr.f32.mxu0 0.0
        %353 = vmatmul.mubr.f32.gmra.mrb[0].mxu0 %v264
        %v354 = vpop.f32.mrb[0].mxu0
        %v355 = vadd.f32 0.0, %v354
        %v356 = vpop.f32.mrb[0].mxu0
        %357 = vmatprep.mubr.f32.mxu0 0.0
        %358 = vmatmul.mubr.f32.gmra.mrb[0].mxu0 %v265
        %v359 = vpop.f32.mrb[0].mxu0
        %v360 = vadd.f32 0.0, %v359
        %v361 = vpop.f32.mrb[0].mxu0
        %362 = vmatprep.mubr.f32.mxu0 0.0
        %363 = vmatmul.mubr.f32.gmra.mrb[0].mxu0 %v266
        %v364 = vpop.f32.mrb[0].mxu0
        %v365 = vadd.f32 0.0, %v364
        %v366 = vpop.f32.mrb[0].mxu0
        %367 = vmatprep.mubr.f32.mxu0 0.0
        %368 = vmatmul.mubr.f32.gmra.mrb[0].mxu0 %v267
        %v369 = vpop.f32.mrb[0].mxu0
        %v370 = vadd.f32 0.0, %v369
        %v371 = vpop.f32.mrb[0].mxu0
        %372 = vmatprep.mubr.f32.mxu0 0.0
        %373 = vmatmul.mubr.f32.gmra.mrb[0].mxu0 %v268
        %v374 = vpop.f32.mrb[0].mxu0
        %v375 = vadd.f32 0.0, %v374
        %v376 = vpop.f32.mrb[0].mxu0
        %377 = vmatprep.mubr.f32.mxu0 0.0
        %378 = vmatmul.mubr.f32.gmra.mrb[0].mxu0 %v269
        %v379 = vpop.f32.mrb[0].mxu0
        %v380 = vadd.f32 0.0, %v379
        %v381 = vpop.f32.mrb[0].mxu0
        %382 = vmatprep.mubr.f32.mxu0 0.0
        %383 = vmatmul.mubr.f32.gmra.mrb[0].mxu0 %v270
        %v384 = vpop.f32.mrb[0].mxu0
        %v385 = vadd.f32 0.0, %v384
        %v386 = vpop.f32.mrb[0].mxu0
        %387 = vmatprep.mubr.f32.mxu0 0.0
        %388 = vmatmul.mubr.f32.gmra.mrb[0].mxu0 %v271
        %v389 = vpop.f32.mrb[0].mxu0
        %v390 = vadd.f32 0.0, %v389
        %v391 = vpop.f32.mrb[0].mxu0
        %392 = vmatprep.mubr.f32.mxu0 0.0
        %393 = vmatmul.mubr.f32.gmra.mrb[0].mxu0 %v272
        %v394 = vpop.f32.mrb[0].mxu0
        %v395 = vadd.f32 0.0, %v394
        %v396 = vpop.f32.mrb[0].mxu0
        %397 = vmatprep.mubr.f32.mxu0 0.0
        %398 = vmatmul.mubr.f32.gmra.mrb[0].mxu0 %v273
        %v399 = vpop.f32.mrb[0].mxu0
        %v400 = vadd.f32 0.0, %v399
        %v401 = vpop.f32.mrb[0].mxu0
        %402 = vmatprep.mubr.f32.mxu0 0.0
        %403 = vmatmul.mubr.f32.gmra.mrb[0].mxu0 %v274
        %v404 = vpop.f32.mrb[0].mxu0
        %v405 = vadd.f32 0.0, %v404
        %v406 = vpop.f32.mrb[0].mxu0
        %407 = vmatprep.mubr.f32.mxu0 0.0
        %408 = vmatmul.mubr.f32.gmra.mrb[0].mxu0 %v275
        %v409 = vpop.f32.mrb[0].mxu0
        %v410 = vadd.f32 0.0, %v409
        %v411 = vpop.f32.mrb[0].mxu0
        %412 = vmatprep.mubr.f32.mxu0 0.0
        %413 = vmatmul.mubr.f32.gmra.mrb[0].mxu0 %v276
        %v414 = vpop.f32.mrb[0].mxu0
        %v415 = vadd.f32 0.0, %v414
        %v416 = vpop.f32.mrb[0].mxu0
        %417 = vmatprep.mubr.f32.mxu0 0.0
        %418 = vmatmul.mubr.f32.gmra.mrb[0].mxu0 %v277
        %v419 = vpop.f32.mrb[0].mxu0
        %v420 = vadd.f32 0.0, %v419
        %v421 = vpop.f32.mrb[0].mxu0
        %422 = vdwg.mxu0
        %v423 = vmul.f32 %v345, 2.0
        %v424 = vmul.f32 %v350, 2.0
        %v425 = vmul.f32 %v355, 2.0
        %v426 = vmul.f32 %v360, 2.0
        %v427 = vmul.f32 %v365, 2.0
        %v428 = vmul.f32 %v370, 2.0
        %v429 = vmul.f32 %v375, 2.0
        %v430 = vmul.f32 %v380, 2.0
        %v431 = vmul.f32 %v385, 2.0
        %v432 = vmul.f32 %v390, 2.0
        %v433 = vmul.f32 %v395, 2.0
        %v434 = vmul.f32 %v400, 2.0
        %v435 = vmul.f32 %v405, 2.0
        %v436 = vmul.f32 %v410, 2.0
        %v437 = vmul.f32 %v415, 2.0
        %v438 = vmul.f32 %v420, 2.0
        %s439 = sadd.s32 %s24, 1
        %p440 = scmp.lt.s32.totalorder %s439, 0
        %s441 = ssub.s32 0, %s439
        %s442 = scalar_select %p440, %s441, %s439
        %s443 = sand.u32 %s442, 1
        %s444 = ssub.s32 0, %s443
        %s445 = scalar_select %p440, %s444, %s443
        %p446 = scmp.ne.s32.totalorder %s445, 0
        %p447 = scmp.lt.s32.totalorder %s445, 0
        %p448 = pnand %p447, %p446
        %p449 = pneg %p448
        %s450 = sadd.s32 %s445, 2
        %s451 = scalar_select %p449, %s450, %s445
        %p452 = scmp.eq.s32.totalorder %s25, %s451
        // Predicated region
        $region41: #{tpu_custom_call.1} parent=27 // pred_check
          %p453 = pneg %p452
        $region42: #{tpu_custom_call.1} parent=27 // pred_check_branch
          %455 = sbr.rel (%p453) target = $region44
        $region43: #{tpu_custom_call.1} parent=27 // pred_region
          %v456 = vlaneseq
          %v457 = vshrl.u32 %v456, 7
          %v458 = vadd.s32 %v457, 8
          %v459 = vadd.s32 %v457, 16
          %v460 = vadd.s32 %v457, 24
          %v461 = vadd.s32 %v457, 32
          %v462 = vadd.s32 %v457, 40
          %v463 = vadd.s32 %v457, 48
          %v464 = vadd.s32 %v457, 56
          %v465 = vadd.s32 %v457, 64
          %v466 = vadd.s32 %v457, 72
          %v467 = vadd.s32 %v457, 80
          %v468 = vadd.s32 %v457, 88
          %v469 = vadd.s32 %v457, 96
          %v470 = vadd.s32 %v457, 104
          %v471 = vadd.s32 %v457, 112
          %v472 = vadd.s32 %v457, 120
          %v473 = vlaneseq
          %v474 = vand.u32 %v473, 127
          %vm475 = vcmp.eq.s32.totalorder %v457, %v474
          %vm476 = vcmp.eq.s32.totalorder %v458, %v474
          %vm477 = vcmp.eq.s32.totalorder %v459, %v474
          %vm478 = vcmp.eq.s32.totalorder %v460, %v474
          %vm479 = vcmp.eq.s32.totalorder %v461, %v474
          %vm480 = vcmp.eq.s32.totalorder %v462, %v474
          %vm481 = vcmp.eq.s32.totalorder %v463, %v474
          %vm482 = vcmp.eq.s32.totalorder %v464, %v474
          %vm483 = vcmp.eq.s32.totalorder %v465, %v474
          %vm484 = vcmp.eq.s32.totalorder %v466, %v474
          %vm485 = vcmp.eq.s32.totalorder %v467, %v474
          %vm486 = vcmp.eq.s32.totalorder %v468, %v474
          %vm487 = vcmp.eq.s32.totalorder %v469, %v474
          %vm488 = vcmp.eq.s32.totalorder %v470, %v474
          %vm489 = vcmp.eq.s32.totalorder %v471, %v474
          %vm490 = vcmp.eq.s32.totalorder %v472, %v474
          %v491 = vsel %vm475, %v423, 0.0
          %v492 = vsel %vm476, %v424, 0.0
          %v493 = vsel %vm477, %v425, 0.0
          %v494 = vsel %vm478, %v426, 0.0
          %v495 = vsel %vm479, %v427, 0.0
          %v496 = vsel %vm480, %v428, 0.0
          %v497 = vsel %vm481, %v429, 0.0
          %v498 = vsel %vm482, %v430, 0.0
          %v499 = vsel %vm483, %v431, 0.0
          %v500 = vsel %vm484, %v432, 0.0
          %v501 = vsel %vm485, %v433, 0.0
          %v502 = vsel %vm486, %v434, 0.0
          %v503 = vsel %vm487, %v435, 0.0
          %v504 = vsel %vm488, %v436, 0.0
          %v505 = vsel %vm489, %v437, 0.0
          %v506 = vsel %vm490, %v438, 0.0
          %507 = vadd.xlane.f32.xlu0 %v491
          %v508 = vpop.xlane.xlu0 %507
          %509 = vadd.xlane.f32.xlu0 %v492
          %v510 = vpop.xlane.xlu0 %509
          %511 = vadd.xlane.f32.xlu0 %v493
          %v512 = vpop.xlane.xlu0 %511
          %513 = vadd.xlane.f32.xlu0 %v494
          %v514 = vpop.xlane.xlu0 %513
          %515 = vadd.xlane.f32.xlu0 %v495
          %v516 = vpop.xlane.xlu0 %515
          %517 = vadd.xlane.f32.xlu0 %v496
          %v518 = vpop.xlane.xlu0 %517
          %519 = vadd.xlane.f32.xlu0 %v497
          %v520 = vpop.xlane.xlu0 %519
          %521 = vadd.xlane.f32.xlu0 %v498
          %v522 = vpop.xlane.xlu0 %521
          %523 = vadd.xlane.f32.xlu0 %v499
          %v524 = vpop.xlane.xlu0 %523
          %525 = vadd.xlane.f32.xlu0 %v500
          %v526 = vpop.xlane.xlu0 %525
          %527 = vadd.xlane.f32.xlu0 %v501
          %v528 = vpop.xlane.xlu0 %527
          %529 = vadd.xlane.f32.xlu0 %v502
          %v530 = vpop.xlane.xlu0 %529
          %531 = vadd.xlane.f32.xlu0 %v503
          %v532 = vpop.xlane.xlu0 %531
          %533 = vadd.xlane.f32.xlu0 %v504
          %v534 = vpop.xlane.xlu0 %533
          %535 = vadd.xlane.f32.xlu0 %v505
          %v536 = vpop.xlane.xlu0 %535
          %537 = vadd.xlane.f32.xlu0 %v506
          %v538 = vpop.xlane.xlu0 %537
          %vm539 = vcmask 7168
          %540 = vst.msk [vmem:[#allocation4] sm:$0xff] %vm539, %v508
          %541 = vst.msk [vmem:[#allocation4 + $0x8] sm:$0xff] %vm539, %v510
          %542 = vst.msk [vmem:[#allocation4 + $0x10] sm:$0xff] %vm539, %v512
          %543 = vst.msk [vmem:[#allocation4 + $0x18] sm:$0xff] %vm539, %v514
          %544 = vst.msk [vmem:[#allocation4 + $0x20] sm:$0xff] %vm539, %v516
          %545 = vst.msk [vmem:[#allocation4 + $0x28] sm:$0xff] %vm539, %v518
          %546 = vst.msk [vmem:[#allocation4 + $0x30] sm:$0xff] %vm539, %v520
          %547 = vst.msk [vmem:[#allocation4 + $0x38] sm:$0xff] %vm539, %v522
          %548 = vst.msk [vmem:[#allocation4 + $0x40] sm:$0xff] %vm539, %v524
          %549 = vst.msk [vmem:[#allocation4 + $0x48] sm:$0xff] %vm539, %v526
          %550 = vst.msk [vmem:[#allocation4 + $0x50] sm:$0xff] %vm539, %v528
          %551 = vst.msk [vmem:[#allocation4 + $0x58] sm:$0xff] %vm539, %v530
          %552 = vst.msk [vmem:[#allocation4 + $0x60] sm:$0xff] %vm539, %v532
          %553 = vst.msk [vmem:[#allocation4 + $0x68] sm:$0xff] %vm539, %v534
          %554 = vst.msk [vmem:[#allocation4 + $0x70] sm:$0xff] %vm539, %v536
          %555 = vst.msk [vmem:[#allocation4 + $0x78] sm:$0xff] %vm539, %v538
        $region44: #{tpu_custom_call.1} parent=27 // pred_fallthru
          _
        %p556 = scmp.eq.s32.totalorder %s24, %s25
        %p557 = scmp.ge.s32.totalorder %s25, 0
        %p558 = scmp.lt.s32.totalorder %s25, 1
        %p559 = pnand %p557, %p558
        %p560 = pneg %p559
        %p561 = scmp.ge.s32.totalorder %s25, 1
        %p562 = por %p560, %p561
        %p563 = por %p556, %p562
        // Predicated region
        $region45: #{tpu_custom_call.1} parent=27 // pred_check
          %p564 = pneg %p563
        $region46: #{tpu_custom_call.1} parent=27 // pred_check_branch
          %566 = sbr.rel (%p564) target = $region48
        $region47: #{tpu_custom_call.1} parent=27 // pred_region
          %s567 = smul.u32 %s24, 128
          %v568 = vlaneseq
          %v569 = vshrl.u32 %v568, 7
          %v570 = vadd.s32 %v569, 8
          %v571 = vadd.s32 %v569, 16
          %v572 = vadd.s32 %v569, 24
          %v573 = vadd.s32 %v569, 32
          %v574 = vadd.s32 %v569, 40
          %v575 = vadd.s32 %v569, 48
          %v576 = vadd.s32 %v569, 56
          %v577 = vadd.s32 %v569, 64
          %v578 = vadd.s32 %v569, 72
          %v579 = vadd.s32 %v569, 80
          %v580 = vadd.s32 %v569, 88
          %v581 = vadd.s32 %v569, 96
          %v582 = vadd.s32 %v569, 104
          %v583 = vadd.s32 %v569, 112
          %v584 = vadd.s32 %v569, 120
          %v585 = vstv %s567
          %v586 = vadd.s32 %v585, %v569
          %v587 = vadd.s32 %v585, %v570
          %v588 = vadd.s32 %v585, %v571
          %v589 = vadd.s32 %v585, %v572
          %v590 = vadd.s32 %v585, %v573
          %v591 = vadd.s32 %v585, %v574
          %v592 = vadd.s32 %v585, %v575
          %v593 = vadd.s32 %v585, %v576
          %v594 = vadd.s32 %v585, %v577
          %v595 = vadd.s32 %v585, %v578
          %v596 = vadd.s32 %v585, %v579
          %v597 = vadd.s32 %v585, %v580
          %v598 = vadd.s32 %v585, %v581
          %v599 = vadd.s32 %v585, %v582
          %v600 = vadd.s32 %v585, %v583
          %v601 = vadd.s32 %v585, %v584
          %v602 = vlaneseq
          %v603 = vand.u32 %v602, 127
          %v604 = vstv %s244
          %v605 = vadd.s32 %v604, %v603
          %vm606 = vcmp.eq.s32.totalorder %v586, %v605
          %vm607 = vcmp.eq.s32.totalorder %v587, %v605
          %vm608 = vcmp.eq.s32.totalorder %v588, %v605
          %vm609 = vcmp.eq.s32.totalorder %v589, %v605
          %vm610 = vcmp.eq.s32.totalorder %v590, %v605
          %vm611 = vcmp.eq.s32.totalorder %v591, %v605
          %vm612 = vcmp.eq.s32.totalorder %v592, %v605
          %vm613 = vcmp.eq.s32.totalorder %v593, %v605
          %vm614 = vcmp.eq.s32.totalorder %v594, %v605
          %vm615 = vcmp.eq.s32.totalorder %v595, %v605
          %vm616 = vcmp.eq.s32.totalorder %v596, %v605
          %vm617 = vcmp.eq.s32.totalorder %v597, %v605
          %vm618 = vcmp.eq.s32.totalorder %v598, %v605
          %vm619 = vcmp.eq.s32.totalorder %v599, %v605
          %vm620 = vcmp.eq.s32.totalorder %v600, %v605
          %vm621 = vcmp.eq.s32.totalorder %v601, %v605
          %vm622 = vcmp.ge.s32.totalorder %v605, 8
          %vm623 = vcmp.lt.s32.totalorder %v605, 128
          %vm624 = vmand %vm622, %vm623
          %vm625 = vmor %vm606, %vm624
          %vm626 = vmor %vm607, %vm624
          %vm627 = vmor %vm608, %vm624
          %vm628 = vmor %vm609, %vm624
          %vm629 = vmor %vm610, %vm624
          %vm630 = vmor %vm611, %vm624
          %vm631 = vmor %vm612, %vm624
          %vm632 = vmor %vm613, %vm624
          %vm633 = vmor %vm614, %vm624
          %vm634 = vmor %vm615, %vm624
          %vm635 = vmor %vm616, %vm624
          %vm636 = vmor %vm617, %vm624
          %vm637 = vmor %vm618, %vm624
          %vm638 = vmor %vm619, %vm624
          %vm639 = vmor %vm620, %vm624
          %vm640 = vmor %vm621, %vm624
          %vm641 = vcmp.ge.s32.totalorder %v605, 136
          %vm642 = vmor %vm625, %vm641
          %vm643 = vmor %vm626, %vm641
          %vm644 = vmor %vm627, %vm641
          %vm645 = vmor %vm628, %vm641
          %vm646 = vmor %vm629, %vm641
          %vm647 = vmor %vm630, %vm641
          %vm648 = vmor %vm631, %vm641
          %vm649 = vmor %vm632, %vm641
          %vm650 = vmor %vm633, %vm641
          %vm651 = vmor %vm634, %vm641
          %vm652 = vmor %vm635, %vm641
          %vm653 = vmor %vm636, %vm641
          %vm654 = vmor %vm637, %vm641
          %vm655 = vmor %vm638, %vm641
          %vm656 = vmor %vm639, %vm641
          %vm657 = vmor %vm640, %vm641
          %v658 = vsel %vm642, -1e+30, %v423
          %v659 = vsel %vm643, -1e+30, %v424
          %v660 = vsel %vm644, -1e+30, %v425
          %v661 = vsel %vm645, -1e+30, %v426
          %v662 = vsel %vm646, -1e+30, %v427
          %v663 = vsel %vm647, -1e+30, %v428
          %v664 = vsel %vm648, -1e+30, %v429
          %v665 = vsel %vm649, -1e+30, %v430
          %v666 = vsel %vm650, -1e+30, %v431
          %v667 = vsel %vm651, -1e+30, %v432
          %v668 = vsel %vm652, -1e+30, %v433
          %v669 = vsel %vm653, -1e+30, %v434
          %v670 = vsel %vm654, -1e+30, %v435
          %v671 = vsel %vm655, -1e+30, %v436
          %v672 = vsel %vm656, -1e+30, %v437
          %v673 = vsel %vm657, -1e+30, %v438
          %v674 = vld [vmem:[#allocation2] sm:$0xff]
          %v675 = vld [vmem:[#allocation2 + $0x8] sm:$0xff]
          %v676 = vld [vmem:[#allocation2 + $0x10] sm:$0xff]
          %v677 = vld [vmem:[#allocation2 + $0x18] sm:$0xff]
          %v678 = vld [vmem:[#allocation2 + $0x20] sm:$0xff]
          %v679 = vld [vmem:[#allocation2 + $0x28] sm:$0xff]
          %v680 = vld [vmem:[#allocation2 + $0x30] sm:$0xff]
          %v681 = vld [vmem:[#allocation2 + $0x38] sm:$0xff]
          %v682 = vld [vmem:[#allocation2 + $0x40] sm:$0xff]
          %v683 = vld [vmem:[#allocation2 + $0x48] sm:$0xff]
          %v684 = vld [vmem:[#allocation2 + $0x50] sm:$0xff]
          %v685 = vld [vmem:[#allocation2 + $0x58] sm:$0xff]
          %v686 = vld [vmem:[#allocation2 + $0x60] sm:$0xff]
          %v687 = vld [vmem:[#allocation2 + $0x68] sm:$0xff]
          %v688 = vld [vmem:[#allocation2 + $0x70] sm:$0xff]
          %v689 = vld [vmem:[#allocation2 + $0x78] sm:$0xff]
          %690 = vmax.xlane.f32.xlu0 %v658
          %v691 = vpop.xlane.xlu0 %690
          %692 = vmax.xlane.f32.xlu0 %v659
          %v693 = vpop.xlane.xlu0 %692
          %694 = vmax.xlane.f32.xlu0 %v660
          %v695 = vpop.xlane.xlu0 %694
          %696 = vmax.xlane.f32.xlu0 %v661
          %v697 = vpop.xlane.xlu0 %696
          %698 = vmax.xlane.f32.xlu0 %v662
          %v699 = vpop.xlane.xlu0 %698
          %700 = vmax.xlane.f32.xlu0 %v663
          %v701 = vpop.xlane.xlu0 %700
          %702 = vmax.xlane.f32.xlu0 %v664
          %v703 = vpop.xlane.xlu0 %702
          %704 = vmax.xlane.f32.xlu0 %v665
          %v705 = vpop.xlane.xlu0 %704
          %706 = vmax.xlane.f32.xlu0 %v666
          %v707 = vpop.xlane.xlu0 %706
          %708 = vmax.xlane.f32.xlu0 %v667
          %v709 = vpop.xlane.xlu0 %708
          %710 = vmax.xlane.f32.xlu0 %v668
          %v711 = vpop.xlane.xlu0 %710
          %712 = vmax.xlane.f32.xlu0 %v669
          %v713 = vpop.xlane.xlu0 %712
          %714 = vmax.xlane.f32.xlu0 %v670
          %v715 = vpop.xlane.xlu0 %714
          %716 = vmax.xlane.f32.xlu0 %v671
          %v717 = vpop.xlane.xlu0 %716
          %718 = vmax.xlane.f32.xlu0 %v672
          %v719 = vpop.xlane.xlu0 %718
          %720 = vmax.xlane.f32.xlu0 %v673
          %v721 = vpop.xlane.xlu0 %720
          %v722 = vmax.f32 %v674, %v691
          %v723 = vmax.f32 %v675, %v693
          %v724 = vmax.f32 %v676, %v695
          %v725 = vmax.f32 %v677, %v697
          %v726 = vmax.f32 %v678, %v699
          %v727 = vmax.f32 %v679, %v701
          %v728 = vmax.f32 %v680, %v703
          %v729 = vmax.f32 %v681, %v705
          %v730 = vmax.f32 %v682, %v707
          %v731 = vmax.f32 %v683, %v709
          %v732 = vmax.f32 %v684, %v711
          %v733 = vmax.f32 %v685, %v713
          %v734 = vmax.f32 %v686, %v715
          %v735 = vmax.f32 %v687, %v717
          %v736 = vmax.f32 %v688, %v719
          %v737 = vmax.f32 %v689, %v721
          %v738 = vsub.f32 %v674, %v722
          %v739 = vsub.f32 %v675, %v723
          %v740 = vsub.f32 %v676, %v724
          %v741 = vsub.f32 %v677, %v725
          %v742 = vsub.f32 %v678, %v726
          %v743 = vsub.f32 %v679, %v727
          %v744 = vsub.f32 %v680, %v728
          %v745 = vsub.f32 %v681, %v729
          %v746 = vsub.f32 %v682, %v730
          %v747 = vsub.f32 %v683, %v731
          %v748 = vsub.f32 %v684, %v732
          %v749 = vsub.f32 %v685, %v733
          %v750 = vsub.f32 %v686, %v734
          %v751 = vsub.f32 %v687, %v735
          %v752 = vsub.f32 %v688, %v736
          %v753 = vsub.f32 %v689, %v737
          %v754 = vmul.f32 %v738, 1.442695
          %v755 = vpow.pop %v754
          %v756 = vmul.f32 %v739, 1.442695
          %v757 = vpow.pop %v756
          %v758 = vmul.f32 %v740, 1.442695
          %v759 = vpow.pop %v758
          %v760 = vmul.f32 %v741, 1.442695
          %v761 = vpow.pop %v760
          %v762 = vmul.f32 %v742, 1.442695
          %v763 = vpow.pop %v762
          %v764 = vmul.f32 %v743, 1.442695
          %v765 = vpow.pop %v764
          %v766 = vmul.f32 %v744, 1.442695
          %v767 = vpow.pop %v766
          %v768 = vmul.f32 %v745, 1.442695
          %v769 = vpow.pop %v768
          %v770 = vmul.f32 %v746, 1.442695
          %v771 = vpow.pop %v770
          %v772 = vmul.f32 %v747, 1.442695
          %v773 = vpow.pop %v772
          %v774 = vmul.f32 %v748, 1.442695
          %v775 = vpow.pop %v774
          %v776 = vmul.f32 %v749, 1.442695
          %v777 = vpow.pop %v776
          %v778 = vmul.f32 %v750, 1.442695
          %v779 = vpow.pop %v778
          %v780 = vmul.f32 %v751, 1.442695
          %v781 = vpow.pop %v780
          %v782 = vmul.f32 %v752, 1.442695
          %v783 = vpow.pop %v782
          %v784 = vmul.f32 %v753, 1.442695
          %v785 = vpow.pop %v784
          %787 = vset.pattern.permute.xlu0 0
          %788 = vperm.xlu0 %787, %v722
          %v789 = vpop.permute.xlu0 %788
          %792 = vset.pattern.permute.xlu0 0
          %793 = vperm.xlu0 %792, %v723
          %v794 = vpop.permute.xlu0 %793
          %797 = vset.pattern.permute.xlu0 0
          %798 = vperm.xlu0 %797, %v724
          %v799 = vpop.permute.xlu0 %798
          %802 = vset.pattern.permute.xlu0 0
          %803 = vperm.xlu0 %802, %v725
          %v804 = vpop.permute.xlu0 %803
          %807 = vset.pattern.permute.xlu0 0
          %808 = vperm.xlu0 %807, %v726
          %v809 = vpop.permute.xlu0 %808
          %812 = vset.pattern.permute.xlu0 0
          %813 = vperm.xlu0 %812, %v727
          %v814 = vpop.permute.xlu0 %813
          %817 = vset.pattern.permute.xlu0 0
          %818 = vperm.xlu0 %817, %v728
          %v819 = vpop.permute.xlu0 %818
          %822 = vset.pattern.permute.xlu0 0
          %823 = vperm.xlu0 %822, %v729
          %v824 = vpop.permute.xlu0 %823
          %827 = vset.pattern.permute.xlu0 0
          %828 = vperm.xlu0 %827, %v730
          %v829 = vpop.permute.xlu0 %828
          %832 = vset.pattern.permute.xlu0 0
          %833 = vperm.xlu0 %832, %v731
          %v834 = vpop.permute.xlu0 %833
          %837 = vset.pattern.permute.xlu0 0
          %838 = vperm.xlu0 %837, %v732
          %v839 = vpop.permute.xlu0 %838
          %842 = vset.pattern.permute.xlu0 0
          %843 = vperm.xlu0 %842, %v733
          %v844 = vpop.permute.xlu0 %843
          %847 = vset.pattern.permute.xlu0 0
          %848 = vperm.xlu0 %847, %v734
          %v849 = vpop.permute.xlu0 %848
          %852 = vset.pattern.permute.xlu0 0
          %853 = vperm.xlu0 %852, %v735
          %v854 = vpop.permute.xlu0 %853
          %857 = vset.pattern.permute.xlu0 0
          %858 = vperm.xlu0 %857, %v736
          %v859 = vpop.permute.xlu0 %858
          %862 = vset.pattern.permute.xlu0 0
          %863 = vperm.xlu0 %862, %v737
          %v864 = vpop.permute.xlu0 %863
          %v866 = vsub.f32 %v658, %v789
          %v867 = vsub.f32 %v659, %v794
          %v868 = vsub.f32 %v660, %v799
          %v869 = vsub.f32 %v661, %v804
          %v870 = vsub.f32 %v662, %v809
          %v871 = vsub.f32 %v663, %v814
          %v872 = vsub.f32 %v664, %v819
          %v873 = vsub.f32 %v665, %v824
          %v874 = vsub.f32 %v666, %v829
          %v875 = vsub.f32 %v667, %v834
          %v876 = vsub.f32 %v668, %v839
          %v877 = vsub.f32 %v669, %v844
          %v878 = vsub.f32 %v670, %v849
          %v879 = vsub.f32 %v671, %v854
          %v880 = vsub.f32 %v672, %v859
          %v881 = vsub.f32 %v673, %v864
          %v882 = vmul.f32 %v866, 1.442695
          %v883 = vpow.pop %v882
          %v884 = vmul.f32 %v867, 1.442695
          %v885 = vpow.pop %v884
          %v886 = vmul.f32 %v868, 1.442695
          %v887 = vpow.pop %v886
          %v888 = vmul.f32 %v869, 1.442695
          %v889 = vpow.pop %v888
          %v890 = vmul.f32 %v870, 1.442695
          %v891 = vpow.pop %v890
          %v892 = vmul.f32 %v871, 1.442695
          %v893 = vpow.pop %v892
          %v894 = vmul.f32 %v872, 1.442695
          %v895 = vpow.pop %v894
          %v896 = vmul.f32 %v873, 1.442695
          %v897 = vpow.pop %v896
          %v898 = vmul.f32 %v874, 1.442695
          %v899 = vpow.pop %v898
          %v900 = vmul.f32 %v875, 1.442695
          %v901 = vpow.pop %v900
          %v902 = vmul.f32 %v876, 1.442695
          %v903 = vpow.pop %v902
          %v904 = vmul.f32 %v877, 1.442695
          %v905 = vpow.pop %v904
          %v906 = vmul.f32 %v878, 1.442695
          %v907 = vpow.pop %v906
          %v908 = vmul.f32 %v879, 1.442695
          %v909 = vpow.pop %v908
          %v910 = vmul.f32 %v880, 1.442695
          %v911 = vpow.pop %v910
          %v912 = vmul.f32 %v881, 1.442695
          %v913 = vpow.pop %v912
          %v914 = vsel %vm642, 0.0, %v883
          %v915 = vsel %vm643, 0.0, %v885
          %v916 = vsel %vm644, 0.0, %v887
          %v917 = vsel %vm645, 0.0, %v889
          %v918 = vsel %vm646, 0.0, %v891
          %v919 = vsel %vm647, 0.0, %v893
          %v920 = vsel %vm648, 0.0, %v895
          %v921 = vsel %vm649, 0.0, %v897
          %v922 = vsel %vm650, 0.0, %v899
          %v923 = vsel %vm651, 0.0, %v901
          %v924 = vsel %vm652, 0.0, %v903
          %v925 = vsel %vm653, 0.0, %v905
          %v926 = vsel %vm654, 0.0, %v907
          %v927 = vsel %vm655, 0.0, %v909
          %v928 = vsel %vm656, 0.0, %v911
          %v929 = vsel %vm657, 0.0, %v913
          %v930 = vld [vmem:[#allocation3] sm:$0xff]
          %v931 = vld [vmem:[#allocation3 + $0x8] sm:$0xff]
          %v932 = vld [vmem:[#allocation3 + $0x10] sm:$0xff]
          %v933 = vld [vmem:[#allocation3 + $0x18] sm:$0xff]
          %v934 = vld [vmem:[#allocation3 + $0x20] sm:$0xff]
          %v935 = vld [vmem:[#allocation3 + $0x28] sm:$0xff]
          %v936 = vld [vmem:[#allocation3 + $0x30] sm:$0xff]
          %v937 = vld [vmem:[#allocation3 + $0x38] sm:$0xff]
          %v938 = vld [vmem:[#allocation3 + $0x40] sm:$0xff]
          %v939 = vld [vmem:[#allocation3 + $0x48] sm:$0xff]
          %v940 = vld [vmem:[#allocation3 + $0x50] sm:$0xff]
          %v941 = vld [vmem:[#allocation3 + $0x58] sm:$0xff]
          %v942 = vld [vmem:[#allocation3 + $0x60] sm:$0xff]
          %v943 = vld [vmem:[#allocation3 + $0x68] sm:$0xff]
          %v944 = vld [vmem:[#allocation3 + $0x70] sm:$0xff]
          %v945 = vld [vmem:[#allocation3 + $0x78] sm:$0xff]
          %v946 = vmul.f32 %v755, %v930
          %v947 = vmul.f32 %v757, %v931
          %v948 = vmul.f32 %v759, %v932
          %v949 = vmul.f32 %v761, %v933
          %v950 = vmul.f32 %v763, %v934
          %v951 = vmul.f32 %v765, %v935
          %v952 = vmul.f32 %v767, %v936
          %v953 = vmul.f32 %v769, %v937
          %v954 = vmul.f32 %v771, %v938
          %v955 = vmul.f32 %v773, %v939
          %v956 = vmul.f32 %v775, %v940
          %v957 = vmul.f32 %v777, %v941
          %v958 = vmul.f32 %v779, %v942
          %v959 = vmul.f32 %v781, %v943
          %v960 = vmul.f32 %v783, %v944
          %v961 = vmul.f32 %v785, %v945
          %962 = vadd.xlane.f32.xlu0 %v914
          %v963 = vpop.xlane.xlu0 %962
          %964 = vadd.xlane.f32.xlu0 %v915
          %v965 = vpop.xlane.xlu0 %964
          %966 = vadd.xlane.f32.xlu0 %v916
          %v967 = vpop.xlane.xlu0 %966
          %968 = vadd.xlane.f32.xlu0 %v917
          %v969 = vpop.xlane.xlu0 %968
          %970 = vadd.xlane.f32.xlu0 %v918
          %v971 = vpop.xlane.xlu0 %970
          %972 = vadd.xlane.f32.xlu0 %v919
          %v973 = vpop.xlane.xlu0 %972
          %974 = vadd.xlane.f32.xlu0 %v920
          %v975 = vpop.xlane.xlu0 %974
          %976 = vadd.xlane.f32.xlu0 %v921
          %v977 = vpop.xlane.xlu0 %976
          %978 = vadd.xlane.f32.xlu0 %v922
          %v979 = vpop.xlane.xlu0 %978
          %980 = vadd.xlane.f32.xlu0 %v923
          %v981 = vpop.xlane.xlu0 %980
          %982 = vadd.xlane.f32.xlu0 %v924
          %v983 = vpop.xlane.xlu0 %982
          %984 = vadd.xlane.f32.xlu0 %v925
          %v985 = vpop.xlane.xlu0 %984
          %986 = vadd.xlane.f32.xlu0 %v926
          %v987 = vpop.xlane.xlu0 %986
          %988 = vadd.xlane.f32.xlu0 %v927
          %v989 = vpop.xlane.xlu0 %988
          %990 = vadd.xlane.f32.xlu0 %v928
          %v991 = vpop.xlane.xlu0 %990
          %992 = vadd.xlane.f32.xlu0 %v929
          %v993 = vpop.xlane.xlu0 %992
          %v994 = vadd.f32 %v946, %v963
          %v995 = vadd.f32 %v947, %v965
          %v996 = vadd.f32 %v948, %v967
          %v997 = vadd.f32 %v949, %v969
          %v998 = vadd.f32 %v950, %v971
          %v999 = vadd.f32 %v951, %v973
          %v1000 = vadd.f32 %v952, %v975
          %v1001 = vadd.f32 %v953, %v977
          %v1002 = vadd.f32 %v954, %v979
          %v1003 = vadd.f32 %v955, %v981
          %v1004 = vadd.f32 %v956, %v983
          %v1005 = vadd.f32 %v957, %v985
          %v1006 = vadd.f32 %v958, %v987
          %v1007 = vadd.f32 %v959, %v989
          %v1008 = vadd.f32 %v960, %v991
          %v1009 = vadd.f32 %v961, %v993
          %vm1010 = vcmask 7168
          %1011 = vst.msk [vmem:[#allocation3] sm:$0xff] %vm1010, %v994
          %1012 = vst.msk [vmem:[#allocation3 + $0x8] sm:$0xff] %vm1010, %v995
          %1013 = vst.msk [vmem:[#allocation3 + $0x10] sm:$0xff] %vm1010, %v996
          %1014 = vst.msk [vmem:[#allocation3 + $0x18] sm:$0xff] %vm1010, %v997
          %1015 = vst.msk [vmem:[#allocation3 + $0x20] sm:$0xff] %vm1010, %v998
          %1016 = vst.msk [vmem:[#allocation3 + $0x28] sm:$0xff] %vm1010, %v999
          %1017 = vst.msk [vmem:[#allocation3 + $0x30] sm:$0xff] %vm1010, %v1000
          %1018 = vst.msk [vmem:[#allocation3 + $0x38] sm:$0xff] %vm1010, %v1001
          %1019 = vst.msk [vmem:[#allocation3 + $0x40] sm:$0xff] %vm1010, %v1002
          %1020 = vst.msk [vmem:[#allocation3 + $0x48] sm:$0xff] %vm1010, %v1003
          %1021 = vst.msk [vmem:[#allocation3 + $0x50] sm:$0xff] %vm1010, %v1004
          %1022 = vst.msk [vmem:[#allocation3 + $0x58] sm:$0xff] %vm1010, %v1005
          %1023 = vst.msk [vmem:[#allocation3 + $0x60] sm:$0xff] %vm1010, %v1006
          %1024 = vst.msk [vmem:[#allocation3 + $0x68] sm:$0xff] %vm1010, %v1007
          %1025 = vst.msk [vmem:[#allocation3 + $0x70] sm:$0xff] %vm1010, %v1008
          %1026 = vst.msk [vmem:[#allocation3 + $0x78] sm:$0xff] %vm1010, %v1009
          %1027 = vst.msk [vmem:[#allocation2] sm:$0xff] %vm1010, %v722
          %1028 = vst.msk [vmem:[#allocation2 + $0x8] sm:$0xff] %vm1010, %v723
          %1029 = vst.msk [vmem:[#allocation2 + $0x10] sm:$0xff] %vm1010, %v724
          %1030 = vst.msk [vmem:[#allocation2 + $0x18] sm:$0xff] %vm1010, %v725
          %1031 = vst.msk [vmem:[#allocation2 + $0x20] sm:$0xff] %vm1010, %v726
          %1032 = vst.msk [vmem:[#allocation2 + $0x28] sm:$0xff] %vm1010, %v727
          %1033 = vst.msk [vmem:[#allocation2 + $0x30] sm:$0xff] %vm1010, %v728
          %1034 = vst.msk [vmem:[#allocation2 + $0x38] sm:$0xff] %vm1010, %v729
          %1035 = vst.msk [vmem:[#allocation2 + $0x40] sm:$0xff] %vm1010, %v730
          %1036 = vst.msk [vmem:[#allocation2 + $0x48] sm:$0xff] %vm1010, %v731
          %1037 = vst.msk [vmem:[#allocation2 + $0x50] sm:$0xff] %vm1010, %v732
          %1038 = vst.msk [vmem:[#allocation2 + $0x58] sm:$0xff] %vm1010, %v733
          %1039 = vst.msk [vmem:[#allocation2 + $0x60] sm:$0xff] %vm1010, %v734
          %1040 = vst.msk [vmem:[#allocation2 + $0x68] sm:$0xff] %vm1010, %v735
          %1041 = vst.msk [vmem:[#allocation2 + $0x70] sm:$0xff] %vm1010, %v736
          %1042 = vst.msk [vmem:[#allocation2 + $0x78] sm:$0xff] %vm1010, %v737
        $region48: #{tpu_custom_call.1} parent=27 // pred_fallthru
          _
        %p1043 = pneg %p563
        // Predicated region
        $region49: #{tpu_custom_call.1} parent=27 // pred_check
          _
        $region50: #{tpu_custom_call.1} parent=27 // pred_check_branch
          %1045 = sbr.rel (%p563) target = $region52
        $region51: #{tpu_custom_call.1} parent=27 // pred_region
          %v1046 = vld [vmem:[#allocation2] sm:$0xff]
          %v1047 = vld [vmem:[#allocation2 + $0x8] sm:$0xff]
          %v1048 = vld [vmem:[#allocation2 + $0x10] sm:$0xff]
          %v1049 = vld [vmem:[#allocation2 + $0x18] sm:$0xff]
          %v1050 = vld [vmem:[#allocation2 + $0x20] sm:$0xff]
          %v1051 = vld [vmem:[#allocation2 + $0x28] sm:$0xff]
          %v1052 = vld [vmem:[#allocation2 + $0x30] sm:$0xff]
          %v1053 = vld [vmem:[#allocation2 + $0x38] sm:$0xff]
          %v1054 = vld [vmem:[#allocation2 + $0x40] sm:$0xff]
          %v1055 = vld [vmem:[#allocation2 + $0x48] sm:$0xff]
          %v1056 = vld [vmem:[#allocation2 + $0x50] sm:$0xff]
          %v1057 = vld [vmem:[#allocation2 + $0x58] sm:$0xff]
          %v1058 = vld [vmem:[#allocation2 + $0x60] sm:$0xff]
          %v1059 = vld [vmem:[#allocation2 + $0x68] sm:$0xff]
          %v1060 = vld [vmem:[#allocation2 + $0x70] sm:$0xff]
          %v1061 = vld [vmem:[#allocation2 + $0x78] sm:$0xff]
          %1062 = vmax.xlane.f32.xlu0 %v423
          %v1063 = vpop.xlane.xlu0 %1062
          %1064 = vmax.xlane.f32.xlu0 %v424
          %v1065 = vpop.xlane.xlu0 %1064
          %1066 = vmax.xlane.f32.xlu0 %v425
          %v1067 = vpop.xlane.xlu0 %1066
          %1068 = vmax.xlane.f32.xlu0 %v426
          %v1069 = vpop.xlane.xlu0 %1068
          %1070 = vmax.xlane.f32.xlu0 %v427
          %v1071 = vpop.xlane.xlu0 %1070
          %1072 = vmax.xlane.f32.xlu0 %v428
          %v1073 = vpop.xlane.xlu0 %1072
          %1074 = vmax.xlane.f32.xlu0 %v429
          %v1075 = vpop.xlane.xlu0 %1074
          %1076 = vmax.xlane.f32.xlu0 %v430
          %v1077 = vpop.xlane.xlu0 %1076
          %1078 = vmax.xlane.f32.xlu0 %v431
          %v1079 = vpop.xlane.xlu0 %1078
          %1080 = vmax.xlane.f32.xlu0 %v432
          %v1081 = vpop.xlane.xlu0 %1080
          %1082 = vmax.xlane.f32.xlu0 %v433
          %v1083 = vpop.xlane.xlu0 %1082
          %1084 = vmax.xlane.f32.xlu0 %v434
          %v1085 = vpop.xlane.xlu0 %1084
          %1086 = vmax.xlane.f32.xlu0 %v435
          %v1087 = vpop.xlane.xlu0 %1086
          %1088 = vmax.xlane.f32.xlu0 %v436
          %v1089 = vpop.xlane.xlu0 %1088
          %1090 = vmax.xlane.f32.xlu0 %v437
          %v1091 = vpop.xlane.xlu0 %1090
          %1092 = vmax.xlane.f32.xlu0 %v438
          %v1093 = vpop.xlane.xlu0 %1092
          %v1094 = vmax.f32 %v1046, %v1063
          %v1095 = vmax.f32 %v1047, %v1065
          %v1096 = vmax.f32 %v1048, %v1067
          %v1097 = vmax.f32 %v1049, %v1069
          %v1098 = vmax.f32 %v1050, %v1071
          %v1099 = vmax.f32 %v1051, %v1073
          %v1100 = vmax.f32 %v1052, %v1075
          %v1101 = vmax.f32 %v1053, %v1077
          %v1102 = vmax.f32 %v1054, %v1079
          %v1103 = vmax.f32 %v1055, %v1081
          %v1104 = vmax.f32 %v1056, %v1083
          %v1105 = vmax.f32 %v1057, %v1085
          %v1106 = vmax.f32 %v1058, %v1087
          %v1107 = vmax.f32 %v1059, %v1089
          %v1108 = vmax.f32 %v1060, %v1091
          %v1109 = vmax.f32 %v1061, %v1093
          %v1110 = vsub.f32 %v1046, %v1094
          %v1111 = vsub.f32 %v1047, %v1095
          %v1112 = vsub.f32 %v1048, %v1096
          %v1113 = vsub.f32 %v1049, %v1097
          %v1114 = vsub.f32 %v1050, %v1098
          %v1115 = vsub.f32 %v1051, %v1099
          %v1116 = vsub.f32 %v1052, %v1100
          %v1117 = vsub.f32 %v1053, %v1101
          %v1118 = vsub.f32 %v1054, %v1102
          %v1119 = vsub.f32 %v1055, %v1103
          %v1120 = vsub.f32 %v1056, %v1104
          %v1121 = vsub.f32 %v1057, %v1105
          %v1122 = vsub.f32 %v1058, %v1106
          %v1123 = vsub.f32 %v1059, %v1107
          %v1124 = vsub.f32 %v1060, %v1108
          %v1125 = vsub.f32 %v1061, %v1109
          %v1126 = vmul.f32 %v1110, 1.442695
          %v1127 = vpow.pop %v1126
          %v1128 = vmul.f32 %v1111, 1.442695
          %v1129 = vpow.pop %v1128
          %v1130 = vmul.f32 %v1112, 1.442695
          %v1131 = vpow.pop %v1130
          %v1132 = vmul.f32 %v1113, 1.442695
          %v1133 = vpow.pop %v1132
          %v1134 = vmul.f32 %v1114, 1.442695
          %v1135 = vpow.pop %v1134
          %v1136 = vmul.f32 %v1115, 1.442695
          %v1137 = vpow.pop %v1136
          %v1138 = vmul.f32 %v1116, 1.442695
          %v1139 = vpow.pop %v1138
          %v1140 = vmul.f32 %v1117, 1.442695
          %v1141 = vpow.pop %v1140
          %v1142 = vmul.f32 %v1118, 1.442695
          %v1143 = vpow.pop %v1142
          %v1144 = vmul.f32 %v1119, 1.442695
          %v1145 = vpow.pop %v1144
          %v1146 = vmul.f32 %v1120, 1.442695
          %v1147 = vpow.pop %v1146
          %v1148 = vmul.f32 %v1121, 1.442695
          %v1149 = vpow.pop %v1148
          %v1150 = vmul.f32 %v1122, 1.442695
          %v1151 = vpow.pop %v1150
          %v1152 = vmul.f32 %v1123, 1.442695
          %v1153 = vpow.pop %v1152
          %v1154 = vmul.f32 %v1124, 1.442695
          %v1155 = vpow.pop %v1154
          %v1156 = vmul.f32 %v1125, 1.442695
          %v1157 = vpow.pop %v1156
          %1159 = vset.pattern.permute.xlu0 0
          %1160 = vperm.xlu0 %1159, %v1094
          %v1161 = vpop.permute.xlu0 %1160
          %1164 = vset.pattern.permute.xlu0 0
          %1165 = vperm.xlu0 %1164, %v1095
          %v1166 = vpop.permute.xlu0 %1165
          %1169 = vset.pattern.permute.xlu0 0
          %1170 = vperm.xlu0 %1169, %v1096
          %v1171 = vpop.permute.xlu0 %1170
          %1174 = vset.pattern.permute.xlu0 0
          %1175 = vperm.xlu0 %1174, %v1097
          %v1176 = vpop.permute.xlu0 %1175
          %1179 = vset.pattern.permute.xlu0 0
          %1180 = vperm.xlu0 %1179, %v1098
          %v1181 = vpop.permute.xlu0 %1180
          %1184 = vset.pattern.permute.xlu0 0
          %1185 = vperm.xlu0 %1184, %v1099
          %v1186 = vpop.permute.xlu0 %1185
          %1189 = vset.pattern.permute.xlu0 0
          %1190 = vperm.xlu0 %1189, %v1100
          %v1191 = vpop.permute.xlu0 %1190
          %1194 = vset.pattern.permute.xlu0 0
          %1195 = vperm.xlu0 %1194, %v1101
          %v1196 = vpop.permute.xlu0 %1195
          %1199 = vset.pattern.permute.xlu0 0
          %1200 = vperm.xlu0 %1199, %v1102
          %v1201 = vpop.permute.xlu0 %1200
          %1204 = vset.pattern.permute.xlu0 0
          %1205 = vperm.xlu0 %1204, %v1103
          %v1206 = vpop.permute.xlu0 %1205
          %1209 = vset.pattern.permute.xlu0 0
          %1210 = vperm.xlu0 %1209, %v1104
          %v1211 = vpop.permute.xlu0 %1210
          %1214 = vset.pattern.permute.xlu0 0
          %1215 = vperm.xlu0 %1214, %v1105
          %v1216 = vpop.permute.xlu0 %1215
          %1219 = vset.pattern.permute.xlu0 0
          %1220 = vperm.xlu0 %1219, %v1106
          %v1221 = vpop.permute.xlu0 %1220
          %1224 = vset.pattern.permute.xlu0 0
          %1225 = vperm.xlu0 %1224, %v1107
          %v1226 = vpop.permute.xlu0 %1225
          %1229 = vset.pattern.permute.xlu0 0
          %1230 = vperm.xlu0 %1229, %v1108
          %v1231 = vpop.permute.xlu0 %1230
          %1234 = vset.pattern.permute.xlu0 0
          %1235 = vperm.xlu0 %1234, %v1109
          %v1236 = vpop.permute.xlu0 %1235
          %v1238 = vsub.f32 %v423, %v1161
          %v1239 = vsub.f32 %v424, %v1166
          %v1240 = vsub.f32 %v425, %v1171
          %v1241 = vsub.f32 %v426, %v1176
          %v1242 = vsub.f32 %v427, %v1181
          %v1243 = vsub.f32 %v428, %v1186
          %v1244 = vsub.f32 %v429, %v1191
          %v1245 = vsub.f32 %v430, %v1196
          %v1246 = vsub.f32 %v431, %v1201
          %v1247 = vsub.f32 %v432, %v1206
          %v1248 = vsub.f32 %v433, %v1211
          %v1249 = vsub.f32 %v434, %v1216
          %v1250 = vsub.f32 %v435, %v1221
          %v1251 = vsub.f32 %v436, %v1226
          %v1252 = vsub.f32 %v437, %v1231
          %v1253 = vsub.f32 %v438, %v1236
          %v1254 = vmul.f32 %v1238, 1.442695
          %v1255 = vpow.pop %v1254
          %v1256 = vmul.f32 %v1239, 1.442695
          %v1257 = vpow.pop %v1256
          %v1258 = vmul.f32 %v1240, 1.442695
          %v1259 = vpow.pop %v1258
          %v1260 = vmul.f32 %v1241, 1.442695
          %v1261 = vpow.pop %v1260
          %v1262 = vmul.f32 %v1242, 1.442695
          %v1263 = vpow.pop %v1262
          %v1264 = vmul.f32 %v1243, 1.442695
          %v1265 = vpow.pop %v1264
          %v1266 = vmul.f32 %v1244, 1.442695
          %v1267 = vpow.pop %v1266
          %v1268 = vmul.f32 %v1245, 1.442695
          %v1269 = vpow.pop %v1268
          %v1270 = vmul.f32 %v1246, 1.442695
          %v1271 = vpow.pop %v1270
          %v1272 = vmul.f32 %v1247, 1.442695
          %v1273 = vpow.pop %v1272
          %v1274 = vmul.f32 %v1248, 1.442695
          %v1275 = vpow.pop %v1274
          %v1276 = vmul.f32 %v1249, 1.442695
          %v1277 = vpow.pop %v1276
          %v1278 = vmul.f32 %v1250, 1.442695
          %v1279 = vpow.pop %v1278
          %v1280 = vmul.f32 %v1251, 1.442695
          %v1281 = vpow.pop %v1280
          %v1282 = vmul.f32 %v1252, 1.442695
          %v1283 = vpow.pop %v1282
          %v1284 = vmul.f32 %v1253, 1.442695
          %v1285 = vpow.pop %v1284
          %v1286 = vld [vmem:[#allocation3] sm:$0xff]
          %v1287 = vld [vmem:[#allocation3 + $0x8] sm:$0xff]
          %v1288 = vld [vmem:[#allocation3 + $0x10] sm:$0xff]
          %v1289 = vld [vmem:[#allocation3 + $0x18] sm:$0xff]
          %v1290 = vld [vmem:[#allocation3 + $0x20] sm:$0xff]
          %v1291 = vld [vmem:[#allocation3 + $0x28] sm:$0xff]
          %v1292 = vld [vmem:[#allocation3 + $0x30] sm:$0xff]
          %v1293 = vld [vmem:[#allocation3 + $0x38] sm:$0xff]
          %v1294 = vld [vmem:[#allocation3 + $0x40] sm:$0xff]
          %v1295 = vld [vmem:[#allocation3 + $0x48] sm:$0xff]
          %v1296 = vld [vmem:[#allocation3 + $0x50] sm:$0xff]
          %v1297 = vld [vmem:[#allocation3 + $0x58] sm:$0xff]
          %v1298 = vld [vmem:[#allocation3 + $0x60] sm:$0xff]
          %v1299 = vld [vmem:[#allocation3 + $0x68] sm:$0xff]
          %v1300 = vld [vmem:[#allocation3 + $0x70] sm:$0xff]
          %v1301 = vld [vmem:[#allocation3 + $0x78] sm:$0xff]
          %v1302 = vmul.f32 %v1127, %v1286
          %v1303 = vmul.f32 %v1129, %v1287
          %v1304 = vmul.f32 %v1131, %v1288
          %v1305 = vmul.f32 %v1133, %v1289
          %v1306 = vmul.f32 %v1135, %v1290
          %v1307 = vmul.f32 %v1137, %v1291
          %v1308 = vmul.f32 %v1139, %v1292
          %v1309 = vmul.f32 %v1141, %v1293
          %v1310 = vmul.f32 %v1143, %v1294
          %v1311 = vmul.f32 %v1145, %v1295
          %v1312 = vmul.f32 %v1147, %v1296
          %v1313 = vmul.f32 %v1149, %v1297
          %v1314 = vmul.f32 %v1151, %v1298
          %v1315 = vmul.f32 %v1153, %v1299
          %v1316 = vmul.f32 %v1155, %v1300
          %v1317 = vmul.f32 %v1157, %v1301
          %1318 = vadd.xlane.f32.xlu0 %v1255
          %v1319 = vpop.xlane.xlu0 %1318
          %1320 = vadd.xlane.f32.xlu0 %v1257
          %v1321 = vpop.xlane.xlu0 %1320
          %1322 = vadd.xlane.f32.xlu0 %v1259
          %v1323 = vpop.xlane.xlu0 %1322
          %1324 = vadd.xlane.f32.xlu0 %v1261
          %v1325 = vpop.xlane.xlu0 %1324
          %1326 = vadd.xlane.f32.xlu0 %v1263
          %v1327 = vpop.xlane.xlu0 %1326
          %1328 = vadd.xlane.f32.xlu0 %v1265
          %v1329 = vpop.xlane.xlu0 %1328
          %1330 = vadd.xlane.f32.xlu0 %v1267
          %v1331 = vpop.xlane.xlu0 %1330
          %1332 = vadd.xlane.f32.xlu0 %v1269
          %v1333 = vpop.xlane.xlu0 %1332
          %1334 = vadd.xlane.f32.xlu0 %v1271
          %v1335 = vpop.xlane.xlu0 %1334
          %1336 = vadd.xlane.f32.xlu0 %v1273
          %v1337 = vpop.xlane.xlu0 %1336
          %1338 = vadd.xlane.f32.xlu0 %v1275
          %v1339 = vpop.xlane.xlu0 %1338
          %1340 = vadd.xlane.f32.xlu0 %v1277
          %v1341 = vpop.xlane.xlu0 %1340
          %1342 = vadd.xlane.f32.xlu0 %v1279
          %v1343 = vpop.xlane.xlu0 %1342
          %1344 = vadd.xlane.f32.xlu0 %v1281
          %v1345 = vpop.xlane.xlu0 %1344
          %1346 = vadd.xlane.f32.xlu0 %v1283
          %v1347 = vpop.xlane.xlu0 %1346
          %1348 = vadd.xlane.f32.xlu0 %v1285
          %v1349 = vpop.xlane.xlu0 %1348
          %v1350 = vadd.f32 %v1302, %v1319
          %v1351 = vadd.f32 %v1303, %v1321
          %v1352 = vadd.f32 %v1304, %v1323
          %v1353 = vadd.f32 %v1305, %v1325
          %v1354 = vadd.f32 %v1306, %v1327
          %v1355 = vadd.f32 %v1307, %v1329
          %v1356 = vadd.f32 %v1308, %v1331
          %v1357 = vadd.f32 %v1309, %v1333
          %v1358 = vadd.f32 %v1310, %v1335
          %v1359 = vadd.f32 %v1311, %v1337
          %v1360 = vadd.f32 %v1312, %v1339
          %v1361 = vadd.f32 %v1313, %v1341
          %v1362 = vadd.f32 %v1314, %v1343
          %v1363 = vadd.f32 %v1315, %v1345
          %v1364 = vadd.f32 %v1316, %v1347
          %v1365 = vadd.f32 %v1317, %v1349
          %vm1366 = vcmask 7168
          %1367 = vst.msk [vmem:[#allocation3] sm:$0xff] %vm1366, %v1350
          %1368 = vst.msk [vmem:[#allocation3 + $0x8] sm:$0xff] %vm1366, %v1351
          %1369 = vst.msk [vmem:[#allocation3 + $0x10] sm:$0xff] %vm1366, %v1352
          %1370 = vst.msk [vmem:[#allocation3 + $0x18] sm:$0xff] %vm1366, %v1353
          %1371 = vst.msk [vmem:[#allocation3 + $0x20] sm:$0xff] %vm1366, %v1354
          %1372 = vst.msk [vmem:[#allocation3 + $0x28] sm:$0xff] %vm1366, %v1355
          %1373 = vst.msk [vmem:[#allocation3 + $0x30] sm:$0xff] %vm1366, %v1356
          %1374 = vst.msk [vmem:[#allocation3 + $0x38] sm:$0xff] %vm1366, %v1357
          %1375 = vst.msk [vmem:[#allocation3 + $0x40] sm:$0xff] %vm1366, %v1358
          %1376 = vst.msk [vmem:[#allocation3 + $0x48] sm:$0xff] %vm1366, %v1359
          %1377 = vst.msk [vmem:[#allocation3 + $0x50] sm:$0xff] %vm1366, %v1360
          %1378 = vst.msk [vmem:[#allocation3 + $0x58] sm:$0xff] %vm1366, %v1361
          %1379 = vst.msk [vmem:[#allocation3 + $0x60] sm:$0xff] %vm1366, %v1362
          %1380 = vst.msk [vmem:[#allocation3 + $0x68] sm:$0xff] %vm1366, %v1363
          %1381 = vst.msk [vmem:[#allocation3 + $0x70] sm:$0xff] %vm1366, %v1364
          %1382 = vst.msk [vmem:[#allocation3 + $0x78] sm:$0xff] %vm1366, %v1365
          %1383 = vst.msk [vmem:[#allocation2] sm:$0xff] %vm1366, %v1094
          %1384 = vst.msk [vmem:[#allocation2 + $0x8] sm:$0xff] %vm1366, %v1095
          %1385 = vst.msk [vmem:[#allocation2 + $0x10] sm:$0xff] %vm1366, %v1096
          %1386 = vst.msk [vmem:[#allocation2 + $0x18] sm:$0xff] %vm1366, %v1097
          %1387 = vst.msk [vmem:[#allocation2 + $0x20] sm:$0xff] %vm1366, %v1098
          %1388 = vst.msk [vmem:[#allocation2 + $0x28] sm:$0xff] %vm1366, %v1099
          %1389 = vst.msk [vmem:[#allocation2 + $0x30] sm:$0xff] %vm1366, %v1100
          %1390 = vst.msk [vmem:[#allocation2 + $0x38] sm:$0xff] %vm1366, %v1101
          %1391 = vst.msk [vmem:[#allocation2 + $0x40] sm:$0xff] %vm1366, %v1102
          %1392 = vst.msk [vmem:[#allocation2 + $0x48] sm:$0xff] %vm1366, %v1103
          %1393 = vst.msk [vmem:[#allocation2 + $0x50] sm:$0xff] %vm1366, %v1104
          %1394 = vst.msk [vmem:[#allocation2 + $0x58] sm:$0xff] %vm1366, %v1105
          %1395 = vst.msk [vmem:[#allocation2 + $0x60] sm:$0xff] %vm1366, %v1106
          %1396 = vst.msk [vmem:[#allocation2 + $0x68] sm:$0xff] %vm1366, %v1107
          %1397 = vst.msk [vmem:[#allocation2 + $0x70] sm:$0xff] %vm1366, %v1108
          %1398 = vst.msk [vmem:[#allocation2 + $0x78] sm:$0xff] %vm1366, %v1109
        $region52: #{tpu_custom_call.1} parent=27 // pred_fallthru
          _
        %p1399 = scmp.eq.s32.totalorder %s25, 1
        // Predicated region
        $region53: #{tpu_custom_call.1} parent=27 // pred_check
          %p1400 = pneg %p1399
        $region54: #{tpu_custom_call.1} parent=27 // pred_check_branch
          %1402 = sbr.rel (%p1400) target = $region56
        $region55: #{tpu_custom_call.1} parent=27 // pred_region
          %v1403 = vld [vmem:[#allocation2] sm:$0xff]
          %v1404 = vld [vmem:[#allocation2 + $0x8] sm:$0xff]
          %v1405 = vld [vmem:[#allocation2 + $0x10] sm:$0xff]
          %v1406 = vld [vmem:[#allocation2 + $0x18] sm:$0xff]
          %v1407 = vld [vmem:[#allocation2 + $0x20] sm:$0xff]
          %v1408 = vld [vmem:[#allocation2 + $0x28] sm:$0xff]
          %v1409 = vld [vmem:[#allocation2 + $0x30] sm:$0xff]
          %v1410 = vld [vmem:[#allocation2 + $0x38] sm:$0xff]
          %v1411 = vld [vmem:[#allocation2 + $0x40] sm:$0xff]
          %v1412 = vld [vmem:[#allocation2 + $0x48] sm:$0xff]
          %v1413 = vld [vmem:[#allocation2 + $0x50] sm:$0xff]
          %v1414 = vld [vmem:[#allocation2 + $0x58] sm:$0xff]
          %v1415 = vld [vmem:[#allocation2 + $0x60] sm:$0xff]
          %v1416 = vld [vmem:[#allocation2 + $0x68] sm:$0xff]
          %v1417 = vld [vmem:[#allocation2 + $0x70] sm:$0xff]
          %v1418 = vld [vmem:[#allocation2 + $0x78] sm:$0xff]
          %v1419 = vld [vmem:[#allocation3] sm:$0xff]
          %v1420 = vld [vmem:[#allocation3 + $0x8] sm:$0xff]
          %v1421 = vld [vmem:[#allocation3 + $0x10] sm:$0xff]
          %v1422 = vld [vmem:[#allocation3 + $0x18] sm:$0xff]
          %v1423 = vld [vmem:[#allocation3 + $0x20] sm:$0xff]
          %v1424 = vld [vmem:[#allocation3 + $0x28] sm:$0xff]
          %v1425 = vld [vmem:[#allocation3 + $0x30] sm:$0xff]
          %v1426 = vld [vmem:[#allocation3 + $0x38] sm:$0xff]
          %v1427 = vld [vmem:[#allocation3 + $0x40] sm:$0xff]
          %v1428 = vld [vmem:[#allocation3 + $0x48] sm:$0xff]
          %v1429 = vld [vmem:[#allocation3 + $0x50] sm:$0xff]
          %v1430 = vld [vmem:[#allocation3 + $0x58] sm:$0xff]
          %v1431 = vld [vmem:[#allocation3 + $0x60] sm:$0xff]
          %v1432 = vld [vmem:[#allocation3 + $0x68] sm:$0xff]
          %v1433 = vld [vmem:[#allocation3 + $0x70] sm:$0xff]
          %v1434 = vld [vmem:[#allocation3 + $0x78] sm:$0xff]
          %v1435 = vlog2.pop %v1419
          %v1436 = vmul.f32 %v1435, 0.6931472
          %v1437 = vlog2.pop %v1420
          %v1438 = vmul.f32 %v1437, 0.6931472
          %v1439 = vlog2.pop %v1421
          %v1440 = vmul.f32 %v1439, 0.6931472
          %v1441 = vlog2.pop %v1422
          %v1442 = vmul.f32 %v1441, 0.6931472
          %v1443 = vlog2.pop %v1423
          %v1444 = vmul.f32 %v1443, 0.6931472
          %v1445 = vlog2.pop %v1424
          %v1446 = vmul.f32 %v1445, 0.6931472
          %v1447 = vlog2.pop %v1425
          %v1448 = vmul.f32 %v1447, 0.6931472
          %v1449 = vlog2.pop %v1426
          %v1450 = vmul.f32 %v1449, 0.6931472
          %v1451 = vlog2.pop %v1427
          %v1452 = vmul.f32 %v1451, 0.6931472
          %v1453 = vlog2.pop %v1428
          %v1454 = vmul.f32 %v1453, 0.6931472
          %v1455 = vlog2.pop %v1429
          %v1456 = vmul.f32 %v1455, 0.6931472
          %v1457 = vlog2.pop %v1430
          %v1458 = vmul.f32 %v1457, 0.6931472
          %v1459 = vlog2.pop %v1431
          %v1460 = vmul.f32 %v1459, 0.6931472
          %v1461 = vlog2.pop %v1432
          %v1462 = vmul.f32 %v1461, 0.6931472
          %v1463 = vlog2.pop %v1433
          %v1464 = vmul.f32 %v1463, 0.6931472
          %v1465 = vlog2.pop %v1434
          %v1466 = vmul.f32 %v1465, 0.6931472
          %v1467 = vadd.f32 %v1403, %v1436
          %v1468 = vadd.f32 %v1404, %v1438
          %v1469 = vadd.f32 %v1405, %v1440
          %v1470 = vadd.f32 %v1406, %v1442
          %v1471 = vadd.f32 %v1407, %v1444
          %v1472 = vadd.f32 %v1408, %v1446
          %v1473 = vadd.f32 %v1409, %v1448
          %v1474 = vadd.f32 %v1410, %v1450
          %v1475 = vadd.f32 %v1411, %v1452
          %v1476 = vadd.f32 %v1412, %v1454
          %v1477 = vadd.f32 %v1413, %v1456
          %v1478 = vadd.f32 %v1414, %v1458
          %v1479 = vadd.f32 %v1415, %v1460
          %v1480 = vadd.f32 %v1416, %v1462
          %v1481 = vadd.f32 %v1417, %v1464
          %v1482 = vadd.f32 %v1418, %v1466
          %v1483 = vld [vmem:[#allocation4] sm:$0xff]
          %v1484 = vld [vmem:[#allocation4 + $0x8] sm:$0xff]
          %v1485 = vld [vmem:[#allocation4 + $0x10] sm:$0xff]
          %v1486 = vld [vmem:[#allocation4 + $0x18] sm:$0xff]
          %v1487 = vld [vmem:[#allocation4 + $0x20] sm:$0xff]
          %v1488 = vld [vmem:[#allocation4 + $0x28] sm:$0xff]
          %v1489 = vld [vmem:[#allocation4 + $0x30] sm:$0xff]
          %v1490 = vld [vmem:[#allocation4 + $0x38] sm:$0xff]
          %v1491 = vld [vmem:[#allocation4 + $0x40] sm:$0xff]
          %v1492 = vld [vmem:[#allocation4 + $0x48] sm:$0xff]
          %v1493 = vld [vmem:[#allocation4 + $0x50] sm:$0xff]
          %v1494 = vld [vmem:[#allocation4 + $0x58] sm:$0xff]
          %v1495 = vld [vmem:[#allocation4 + $0x60] sm:$0xff]
          %v1496 = vld [vmem:[#allocation4 + $0x68] sm:$0xff]
          %v1497 = vld [vmem:[#allocation4 + $0x70] sm:$0xff]
          %v1498 = vld [vmem:[#allocation4 + $0x78] sm:$0xff]
          %v1499 = vsub.f32 %v1467, %v1483
          %v1500 = vsub.f32 %v1468, %v1484
          %v1501 = vsub.f32 %v1469, %v1485
          %v1502 = vsub.f32 %v1470, %v1486
          %v1503 = vsub.f32 %v1471, %v1487
          %v1504 = vsub.f32 %v1472, %v1488
          %v1505 = vsub.f32 %v1473, %v1489
          %v1506 = vsub.f32 %v1474, %v1490
          %v1507 = vsub.f32 %v1475, %v1491
          %v1508 = vsub.f32 %v1476, %v1492
          %v1509 = vsub.f32 %v1477, %v1493
          %v1510 = vsub.f32 %v1478, %v1494
          %v1511 = vsub.f32 %v1479, %v1495
          %v1512 = vsub.f32 %v1480, %v1496
          %v1513 = vsub.f32 %v1481, %v1497
          %v1514 = vsub.f32 %v1482, %v1498
          %s1515 = smul.u32 %s24, 128
          %v1516 = vlaneseq
          %v1517 = vshrl.u32 %v1516, 7
          %v1518 = vadd.s32 %v1517, 8
          %v1519 = vadd.s32 %v1517, 16
          %v1520 = vadd.s32 %v1517, 24
          %v1521 = vadd.s32 %v1517, 32
          %v1522 = vadd.s32 %v1517, 40
          %v1523 = vadd.s32 %v1517, 48
          %v1524 = vadd.s32 %v1517, 56
          %v1525 = vadd.s32 %v1517, 64
          %v1526 = vadd.s32 %v1517, 72
          %v1527 = vadd.s32 %v1517, 80
          %v1528 = vadd.s32 %v1517, 88
          %v1529 = vadd.s32 %v1517, 96
          %v1530 = vadd.s32 %v1517, 104
          %v1531 = vadd.s32 %v1517, 112
          %v1532 = vadd.s32 %v1517, 120
          %v1533 = vstv %s1515
          %v1534 = vadd.s32 %v1533, %v1517
          %v1535 = vadd.s32 %v1533, %v1518
          %v1536 = vadd.s32 %v1533, %v1519
          %v1537 = vadd.s32 %v1533, %v1520
          %v1538 = vadd.s32 %v1533, %v1521
          %v1539 = vadd.s32 %v1533, %v1522
          %v1540 = vadd.s32 %v1533, %v1523
          %v1541 = vadd.s32 %v1533, %v1524
          %v1542 = vadd.s32 %v1533, %v1525
          %v1543 = vadd.s32 %v1533, %v1526
          %v1544 = vadd.s32 %v1533, %v1527
          %v1545 = vadd.s32 %v1533, %v1528
          %v1546 = vadd.s32 %v1533, %v1529
          %v1547 = vadd.s32 %v1533, %v1530
          %v1548 = vadd.s32 %v1533, %v1531
          %v1549 = vadd.s32 %v1533, %v1532
          %vm1550 = vcmp.lt.s32.totalorder %v1534, 8
          %vm1551 = vcmp.lt.s32.totalorder %v1535, 8
          %vm1552 = vcmp.lt.s32.totalorder %v1536, 8
          %vm1553 = vcmp.lt.s32.totalorder %v1537, 8
          %vm1554 = vcmp.lt.s32.totalorder %v1538, 8
          %vm1555 = vcmp.lt.s32.totalorder %v1539, 8
          %vm1556 = vcmp.lt.s32.totalorder %v1540, 8
          %vm1557 = vcmp.lt.s32.totalorder %v1541, 8
          %vm1558 = vcmp.lt.s32.totalorder %v1542, 8
          %vm1559 = vcmp.lt.s32.totalorder %v1543, 8
          %vm1560 = vcmp.lt.s32.totalorder %v1544, 8
          %vm1561 = vcmp.lt.s32.totalorder %v1545, 8
          %vm1562 = vcmp.lt.s32.totalorder %v1546, 8
          %vm1563 = vcmp.lt.s32.totalorder %v1547, 8
          %vm1564 = vcmp.lt.s32.totalorder %v1548, 8
          %vm1565 = vcmp.lt.s32.totalorder %v1549, 8
          %vm1566 = vcmp.ge.s32.totalorder %v1534, 128
          %vm1567 = vcmp.ge.s32.totalorder %v1535, 128
          %vm1568 = vcmp.ge.s32.totalorder %v1536, 128
          %vm1569 = vcmp.ge.s32.totalorder %v1537, 128
          %vm1570 = vcmp.ge.s32.totalorder %v1538, 128
          %vm1571 = vcmp.ge.s32.totalorder %v1539, 128
          %vm1572 = vcmp.ge.s32.totalorder %v1540, 128
          %vm1573 = vcmp.ge.s32.totalorder %v1541, 128
          %vm1574 = vcmp.ge.s32.totalorder %v1542, 128
          %vm1575 = vcmp.ge.s32.totalorder %v1543, 128
          %vm1576 = vcmp.ge.s32.totalorder %v1544, 128
          %vm1577 = vcmp.ge.s32.totalorder %v1545, 128
          %vm1578 = vcmp.ge.s32.totalorder %v1546, 128
          %vm1579 = vcmp.ge.s32.totalorder %v1547, 128
          %vm1580 = vcmp.ge.s32.totalorder %v1548, 128
          %vm1581 = vcmp.ge.s32.totalorder %v1549, 128
          %vm1582 = vcmp.lt.s32.totalorder %v1534, 136
          %vm1583 = vcmp.lt.s32.totalorder %v1535, 136
          %vm1584 = vcmp.lt.s32.totalorder %v1536, 136
          %vm1585 = vcmp.lt.s32.totalorder %v1537, 136
          %vm1586 = vcmp.lt.s32.totalorder %v1538, 136
          %vm1587 = vcmp.lt.s32.totalorder %v1539, 136
          %vm1588 = vcmp.lt.s32.totalorder %v1540, 136
          %vm1589 = vcmp.lt.s32.totalorder %v1541, 136
          %vm1590 = vcmp.lt.s32.totalorder %v1542, 136
          %vm1591 = vcmp.lt.s32.totalorder %v1543, 136
          %vm1592 = vcmp.lt.s32.totalorder %v1544, 136
          %vm1593 = vcmp.lt.s32.totalorder %v1545, 136
          %vm1594 = vcmp.lt.s32.totalorder %v1546, 136
          %vm1595 = vcmp.lt.s32.totalorder %v1547, 136
          %vm1596 = vcmp.lt.s32.totalorder %v1548, 136
          %vm1597 = vcmp.lt.s32.totalorder %v1549, 136
          %vm1598 = vmand %vm1566, %vm1582
          %vm1599 = vmand %vm1567, %vm1583
          %vm1600 = vmand %vm1568, %vm1584
          %vm1601 = vmand %vm1569, %vm1585
          %vm1602 = vmand %vm1570, %vm1586
          %vm1603 = vmand %vm1571, %vm1587
          %vm1604 = vmand %vm1572, %vm1588
          %vm1605 = vmand %vm1573, %vm1589
          %vm1606 = vmand %vm1574, %vm1590
          %vm1607 = vmand %vm1575, %vm1591
          %vm1608 = vmand %vm1576, %vm1592
          %vm1609 = vmand %vm1577, %vm1593
          %vm1610 = vmand %vm1578, %vm1594
          %vm1611 = vmand %vm1579, %vm1595
          %vm1612 = vmand %vm1580, %vm1596
          %vm1613 = vmand %vm1581, %vm1597
          %vm1614 = vmor %vm1550, %vm1598
          %vm1615 = vmor %vm1551, %vm1599
          %vm1616 = vmor %vm1552, %vm1600
          %vm1617 = vmor %vm1553, %vm1601
          %vm1618 = vmor %vm1554, %vm1602
          %vm1619 = vmor %vm1555, %vm1603
          %vm1620 = vmor %vm1556, %vm1604
          %vm1621 = vmor %vm1557, %vm1605
          %vm1622 = vmor %vm1558, %vm1606
          %vm1623 = vmor %vm1559, %vm1607
          %vm1624 = vmor %vm1560, %vm1608
          %vm1625 = vmor %vm1561, %vm1609
          %vm1626 = vmor %vm1562, %vm1610
          %vm1627 = vmor %vm1563, %vm1611
          %vm1628 = vmor %vm1564, %vm1612
          %vm1629 = vmor %vm1565, %vm1613
          %v1630 = vsel %vm1614, %v1499, 0.0
          %v1631 = vsel %vm1615, %v1500, 0.0
          %v1632 = vsel %vm1616, %v1501, 0.0
          %v1633 = vsel %vm1617, %v1502, 0.0
          %v1634 = vsel %vm1618, %v1503, 0.0
          %v1635 = vsel %vm1619, %v1504, 0.0
          %v1636 = vsel %vm1620, %v1505, 0.0
          %v1637 = vsel %vm1621, %v1506, 0.0
          %v1638 = vsel %vm1622, %v1507, 0.0
          %v1639 = vsel %vm1623, %v1508, 0.0
          %v1640 = vsel %vm1624, %v1509, 0.0
          %v1641 = vsel %vm1625, %v1510, 0.0
          %v1642 = vsel %vm1626, %v1511, 0.0
          %v1643 = vsel %vm1627, %v1512, 0.0
          %v1644 = vsel %vm1628, %v1513, 0.0
          %v1645 = vsel %vm1629, %v1514, 0.0
          %1647 = vset.pattern.permute.xlu0 0
          %1648 = vperm.xlu0 %1647, %v1630
          %v1649 = vpop.permute.xlu0 %1648
          %1652 = vset.pattern.permute.xlu0 0
          %1653 = vperm.xlu0 %1652, %v1631
          %v1654 = vpop.permute.xlu0 %1653
          %1657 = vset.pattern.permute.xlu0 0
          %1658 = vperm.xlu0 %1657, %v1632
          %v1659 = vpop.permute.xlu0 %1658
          %1662 = vset.pattern.permute.xlu0 0
          %1663 = vperm.xlu0 %1662, %v1633
          %v1664 = vpop.permute.xlu0 %1663
          %1667 = vset.pattern.permute.xlu0 0
          %1668 = vperm.xlu0 %1667, %v1634
          %v1669 = vpop.permute.xlu0 %1668
          %1672 = vset.pattern.permute.xlu0 0
          %1673 = vperm.xlu0 %1672, %v1635
          %v1674 = vpop.permute.xlu0 %1673
          %1677 = vset.pattern.permute.xlu0 0
          %1678 = vperm.xlu0 %1677, %v1636
          %v1679 = vpop.permute.xlu0 %1678
          %1682 = vset.pattern.permute.xlu0 0
          %1683 = vperm.xlu0 %1682, %v1637
          %v1684 = vpop.permute.xlu0 %1683
          %1687 = vset.pattern.permute.xlu0 0
          %1688 = vperm.xlu0 %1687, %v1638
          %v1689 = vpop.permute.xlu0 %1688
          %1692 = vset.pattern.permute.xlu0 0
          %1693 = vperm.xlu0 %1692, %v1639
          %v1694 = vpop.permute.xlu0 %1693
          %1697 = vset.pattern.permute.xlu0 0
          %1698 = vperm.xlu0 %1697, %v1640
          %v1699 = vpop.permute.xlu0 %1698
          %1702 = vset.pattern.permute.xlu0 0
          %1703 = vperm.xlu0 %1702, %v1641
          %v1704 = vpop.permute.xlu0 %1703
          %1707 = vset.pattern.permute.xlu0 0
          %1708 = vperm.xlu0 %1707, %v1642
          %v1709 = vpop.permute.xlu0 %1708
          %1712 = vset.pattern.permute.xlu0 0
          %1713 = vperm.xlu0 %1712, %v1643
          %v1714 = vpop.permute.xlu0 %1713
          %1717 = vset.pattern.permute.xlu0 0
          %1718 = vperm.xlu0 %1717, %v1644
          %v1719 = vpop.permute.xlu0 %1718
          %1722 = vset.pattern.permute.xlu0 0
          %1723 = vperm.xlu0 %1722, %v1645
          %v1724 = vpop.permute.xlu0 %1723
          %1726 = vst [vmem:[%s188] sm:$0xff] %v1649
          %1727 = vst [vmem:[%s188 + $0x8] sm:$0xff] %v1654
          %1728 = vst [vmem:[%s188 + $0x10] sm:$0xff] %v1659
          %1729 = vst [vmem:[%s188 + $0x18] sm:$0xff] %v1664
          %1730 = vst [vmem:[%s188 + $0x20] sm:$0xff] %v1669
          %1731 = vst [vmem:[%s188 + $0x28] sm:$0xff] %v1674
          %1732 = vst [vmem:[%s188 + $0x30] sm:$0xff] %v1679
          %1733 = vst [vmem:[%s188 + $0x38] sm:$0xff] %v1684
          %1734 = vst [vmem:[%s188 + $0x40] sm:$0xff] %v1689
          %1735 = vst [vmem:[%s188 + $0x48] sm:$0xff] %v1694
          %1736 = vst [vmem:[%s188 + $0x50] sm:$0xff] %v1699
          %1737 = vst [vmem:[%s188 + $0x58] sm:$0xff] %v1704
          %1738 = vst [vmem:[%s188 + $0x60] sm:$0xff] %v1709
          %1739 = vst [vmem:[%s188 + $0x68] sm:$0xff] %v1714
          %1740 = vst [vmem:[%s188 + $0x70] sm:$0xff] %v1719
          %1741 = vst [vmem:[%s188 + $0x78] sm:$0xff] %v1724
        $region56: #{tpu_custom_call.1} parent=27 // pred_fallthru
          _
        %s1742 = sand.u32 %s87, 1
        %s1743 = scalar_lea.sflag [#allocation7], %s1742
        %s1744 = sand.u32 %s87, 1
        %s1745 = smul.addr %s1744, 128
        %s1746 = scalar_lea.vmem [#allocation10], %s1745
        // Predicated region
        $region57: #{tpu_custom_call.1} parent=27 // pred_check
          %p1747 = pneg %p97
        $region58: #{tpu_custom_call.1} parent=27 // pred_check_branch
          %1749 = sbr.rel (%p1747) target = $region60
        $region59: #{tpu_custom_call.1} parent=27 // pred_region
          %s1750 = smul.u32 16, %s24
          %s1752 = ssub.s32 2048, 2048
          %1753 = vsyncadd %s1743, %s1752
          %s1754 = smul.addr %s1750, 128
          %s1755 = scalar_lea.hbm %s2, %s1754
          %s1756 = sshll.u32 %s1746, 4
          %s1757 = int_to_ptr.vmem [resolvable:$true] %s1756
          %1762 = dma.vmem_to_hbm [thread:$0]  %s1757, 2048, %s1755, %s1743, 128, 128, 8
        $region60: #{tpu_custom_call.1} parent=27 // pred_fallthru
          _
      $region28: #{tpu_custom_call.1} parent=5 // pred_fallthru
        _
      %p1763 = scmp.le.s32.totalorder 2, %s15
      // Predicated region
      $region61: #{tpu_custom_call.1} parent=5 // pred_check
        %p1764 = pneg %p1763
      $region62: #{tpu_custom_call.1} parent=5 // pred_check_branch
        %1766 = sbr.rel (%p1764) target = $region64
      $region63: #{tpu_custom_call.1} parent=5 // pred_region
        %s1767 = ssub.s32 %s15, 2
        // Predicated region
        $region65: #{tpu_custom_call.1} parent=63 // pred_check
          %p1768 = pneg %p103
        $region66: #{tpu_custom_call.1} parent=63 // pred_check_branch
          %1770 = sbr.rel (%p1768) target = $region68
        $region67: #{tpu_custom_call.1} parent=63 // pred_region
          %s1771 = sand.u32 %s88, 1
          %s1772 = scalar_lea.sflag [#allocation7], %s1771
          %s1773 = sand.u32 %s88, 1
          %s1774 = smul.addr %s1773, 128
          %s1775 = scalar_lea.vmem [#allocation10], %s1774
          %1776 = dma.done %s1772, 2048
        $region68: #{tpu_custom_call.1} parent=63 // pred_fallthru
          _
      $region64: #{tpu_custom_call.1} parent=5 // pred_fallthru
        _
    $region6: #{tpu_custom_call.1} parent=1 // loop_footer
      %s19 = sadd.s32 1, %s15
    $region7: #{tpu_custom_call.1} parent=1 // loop_footer_branch
      %14 = sbr.rel target = $region3
    $region8: #{tpu_custom_call.1} parent=1 // loop_exit
      _
    %1777 = vsyncpa [#allocation6], 1
    %s1778 = scalar_lea.sflag [#allocation6], 1
    %1779 = vsyncpa %s1778, 1
    %1780 = vsyncpa [#allocation9], 1
    %1781 = vsyncpa [#allocation7], 1
    %s1782 = scalar_lea.sflag [#allocation7], 1
    %1783 = vsyncpa %s1782, 1

</llo_original>
